<compile_context>
chip_gen: v7x
topology: tpu7x:2x2x1
jax: 0.10.0
libtpu: 0.0.40
codegen_flags: <defaults>
</compile_context>

<pallas_src>
import functools

import jax
import jax.numpy as jnp
from jax.experimental import pallas as pl
from jax.experimental.pallas import tpu as pltpu


def _mhca_kernel(x_ref, y_ref, wqt_ref, wkvt_ref, gamma_ref, beta_ref,
                 o_ref, kv_scr, acc_ref, *, num_heads, eps):
    gamma = gamma_ref[...].astype(jnp.float32)   # (1, E)
    beta = beta_ref[...].astype(jnp.float32)     # (1, E)

    E = o_ref.shape[-1]
    D = E // num_heads
    mm_dtype = wqt_ref.dtype          # matmul-input dtype (f32 or bf16)
    cache_dtype = kv_scr.dtype        # K/V cache dtype

    def layer_norm(t):
        mu = jnp.mean(t, axis=-1, keepdims=True)
        c = t - mu
        var = jnp.mean(c * c, axis=-1, keepdims=True)
        return c * jax.lax.rsqrt(var + eps) * gamma + beta

    # ---- per-batch K/V path (hoisted) ----
    # Grid is (B, M-tiles) with the m axis "arbitrary": program_id(1) == 0 is
    # the first query tile of every batch, so LayerNorm(x) and the fused KV
    # projection run ONCE per batch and are cached in VMEM scratch instead of
    # being recomputed for every query tile.
    @pl.when(pl.program_id(1) == 0)
    def _compute_kv_cache():
        xn = layer_norm(x_ref[0].astype(jnp.float32))              # (N, E)
        # Fused K/V projection: (N, E) @ (E, 2E); k = [:, :E], v = [:, E:].
        kv = jnp.dot(xn.astype(mm_dtype), wkvt_ref[...],
                     preferred_element_type=jnp.float32)           # (N, 2E)
        kv_scr[...] = kv.astype(cache_dtype)

    # ---- per-query-tile path ----
    yn = layer_norm(y_ref[0].astype(jnp.float32))                  # (tm, E)
    # Softmax scale is already folded into wqt on the host.
    q = jnp.dot(yn.astype(mm_dtype), wqt_ref[...],
                preferred_element_type=jnp.float32)                # (tm, E)
    q = q.astype(cache_dtype)

    # Static loop over heads; column slices only (no in-kernel head reshape).
    for h in range(num_heads):
        lo = h * D
        qh = q[:, lo:lo + D]                          # (tm, D)
        kh = kv_scr[:, lo:lo + D]                     # (N, D)  from cache
        vh = kv_scr[:, E + lo:E + lo + D]             # (N, D)  from cache
        # Contract last dims directly -> no explicit K transpose in-kernel.
        # TODO(synk): if the NT dot lowers with a per-head XLU transpose of
        # kh, cache K pre-transposed (E, N) once per batch alongside kv.
        s = jax.lax.dot_general(qh, kh, (((1,), (1,)), ((), ())),
                                preferred_element_type=jnp.float32)  # (tm, N)
        s = s - jnp.max(s, axis=-1, keepdims=True)
        p = jnp.exp(s)                                               # f32
        l = jnp.sum(p, axis=-1, keepdims=True)                       # (tm, 1)
        oh = jnp.dot(p.astype(cache_dtype), vh,
                     preferred_element_type=jnp.float32)             # (tm, D)
        # Deferred softmax normalization: scale the (tm, D) head output, not
        # the (tm, N) probabilities; reciprocal goes to the EUP slot.
        acc_ref[:, lo:lo + D] = oh * pl.reciprocal(l, approx=True)

    # Residual with the LayerNorm-ed y (matches the PyTorch forward).
    # acc_ref needs no zeroing: the head loop writes all E columns (H*D == E).
    o_ref[0] = (acc_ref[...] + yn).astype(o_ref.dtype)


def _pick_query_tile(M, cap=256):
    """Largest divisor of M <= cap that satisfies the (8,128) block rule."""
    if M <= cap:
        return M
    for t in range(cap, 7, -1):
        if M % t == 0 and t % 8 == 0:
            return t
    # TODO(synk): pad M instead of falling back to a single huge tile.
    return M


def multi_head_cross_attention(x, y, wq, wk, wv, gamma, beta,
                               *, num_heads, qk_scale=None, eps=1e-5,
                               tm=None, weight_dtype=None,
                               vmem_limit_bytes=None):
    B, N, E = x.shape
    _, M, _ = y.shape
    assert E % num_heads == 0, "dim must be divisible by num_heads"
    head_dim = E // num_heads
    scale = qk_scale if qk_scale is not None else head_dim ** (-0.5)

    # Host-side (one-time) weight prep:
    #   * pre-transpose so the kernel does in @ Wt (no per-step XLU transpose)
    #   * fold the softmax scale into the Q weight
    #   * fuse Wk/Wv into one (E, 2E) matrix for a single wide MXU matmul
    #   * optional bf16 cast (f32 accumulation stays in the kernel)
    wqt = (wq * scale).T                            # (E, E)
    wkvt = jnp.concatenate([wk.T, wv.T], axis=1)    # (E, 2E)
    if weight_dtype is not None:
        wqt = wqt.astype(weight_dtype)
        wkvt = wkvt.astype(weight_dtype)
    cache_dtype = wqt.dtype

    gamma2 = gamma.reshape(1, E)
    beta2 = beta.reshape(1, E)

    # Query tiling: bounded VMEM per step, never a giant tm = M fallback for
    # tileable M.
    if tm is None:
        tm = _pick_query_tile(M)
    assert M % tm == 0, "M must be divisible by the query tile size"
    assert tm == M or tm % 8 == 0, "query tile must satisfy the (8,128) rule"
    mt = M // tm

    kernel = functools.partial(_mhca_kernel, num_heads=num_heads, eps=eps)

    # Batch axis "parallel" (megacore split on v7x), m axis "arbitrary" so the
    # per-batch KV-cache initialization (program_id(1) == 0) is valid.
    cp_kwargs = dict(dimension_semantics=("parallel", "arbitrary"))
    if vmem_limit_bytes is not None:
        cp_kwargs["vmem_limit_bytes"] = vmem_limit_bytes

    return pl.pallas_call(
        kernel,
        out_shape=jax.ShapeDtypeStruct((B, M, E), y.dtype),
        grid_spec=pltpu.PrefetchScalarGridSpec(
            num_scalar_prefetch=0,
            grid=(B, mt),
            in_specs=[
                pl.BlockSpec((1, N, E), lambda b, m: (b, 0, 0)),    # x (k/v src)
                pl.BlockSpec((1, tm, E), lambda b, m: (b, m, 0)),   # y tile
                pl.BlockSpec((E, E), lambda b, m: (0, 0)),          # Wq^T * scale
                pl.BlockSpec((E, 2 * E), lambda b, m: (0, 0)),      # [Wk^T | Wv^T]
                pl.BlockSpec((1, E), lambda b, m: (0, 0)),          # ln gamma
                pl.BlockSpec((1, E), lambda b, m: (0, 0)),          # ln beta
            ],
            out_specs=pl.BlockSpec((1, tm, E), lambda b, m: (b, m, 0)),
            scratch_shapes=[
                pltpu.VMEM((N, 2 * E), cache_dtype),   # per-batch K/V cache
                pltpu.VMEM((tm, E), jnp.float32),      # head-output accumulator
            ],
        ),
        compiler_params=pltpu.CompilerParams(**cp_kwargs),
    )(x, y, wqt, wkvt, gamma2, beta2)


def _reference(x, y, wq, wk, wv, gamma, beta, *, num_heads, eps=1e-5):
    """Pure-JAX reference mirroring the PyTorch forward."""
    B, N, E = x.shape
    _, M, _ = y.shape
    D = E // num_heads
    scale = D ** (-0.5)

    def ln(t):
        mu = jnp.mean(t, axis=-1, keepdims=True)
        var = jnp.mean((t - mu) ** 2, axis=-1, keepdims=True)
        return (t - mu) / jnp.sqrt(var + eps) * gamma + beta

    xn = ln(x)
    yn = ln(y)
    k = xn @ wk.T
    v = xn @ wv.T
    q = yn @ wq.T
    k = k.reshape(B, N, num_heads, D).transpose(0, 2, 1, 3)
    v = v.reshape(B, N, num_heads, D).transpose(0, 2, 1, 3)
    q = q.reshape(B, M, num_heads, D).transpose(0, 2, 1, 3)
    attn = jax.nn.softmax(jnp.einsum('bhmd,bhnd->bhmn', q, k) * scale, axis=-1)
    out = jnp.einsum('bhmn,bhnd->bhmd', attn, v)
    out = out.transpose(0, 2, 1, 3).reshape(B, M, E)
    return out + yn


if __name__ == "__main__":
    # Small, module-consistent shapes (M chosen so mt > 1 to exercise the
    # per-batch KV-cache reuse across query tiles).
    B = 2
    N = 16          # seq_len_x (key/value length)
    M = 16          # seq_len_y (query length)
    E = 32          # dim
    H = 4           # num_heads (E % H == 0)

    key = jax.random.PRNGKey(0)
    kx, ky, kq, kk, kv_, kg, kb = jax.random.split(key, 7)

    x = jax.random.normal(kx, (B, N, E), dtype=jnp.float32)
    y = jax.random.normal(ky, (B, M, E), dtype=jnp.float32)

    # Deterministic synthetic parameters (nn.Linear weights are (out, in)).
    wq = 0.05 * jax.random.normal(kq, (E, E), dtype=jnp.float32)
    wk = 0.05 * jax.random.normal(kk, (E, E), dtype=jnp.float32)
    wv = 0.05 * jax.random.normal(kv_, (E, E), dtype=jnp.float32)
    gamma = 1.0 + 0.1 * jax.random.normal(kg, (E,), dtype=jnp.float32)
    beta = 0.1 * jax.random.normal(kb, (E,), dtype=jnp.float32)

    ref = _reference(x, y, wq, wk, wv, gamma, beta, num_heads=H)

    # f32 path, tm=8 -> 2 query tiles per batch (tests the KV-cache hoist).
    out = multi_head_cross_attention(x, y, wq, wk, wv, gamma, beta,
                                     num_heads=H, tm=8)
    out = jax.block_until_ready(out)
    assert out.shape == (B, M, E)
    assert jnp.allclose(out, ref, atol=2e-3, rtol=2e-3), "f32 mismatch vs reference"

    # bf16 weight / KV-cache path (f32 accumulation), looser tolerance.
    out_bf16 = multi_head_cross_attention(x, y, wq, wk, wv, gamma, beta,
                                          num_heads=H,
                                          weight_dtype=jnp.bfloat16)
    out_bf16 = jax.block_until_ready(out_bf16)
    assert out_bf16.shape == (B, M, E)
    assert jnp.allclose(out_bf16, ref, atol=5e-2, rtol=5e-2), "bf16 mismatch vs reference"

    print("KERNEL_OK")
</pallas_src>

<mosaic_0001>
module attributes {stable_mosaic.version = 11 : i64} {
  func.func @_mhca_kernel(%arg0: i32, %arg1: i32, %arg2: memref<1x16x32xf32, #tpu.memory_space<vmem>>, %arg3: memref<1x8x32xf32, #tpu.memory_space<vmem>>, %arg4: memref<32x32xf32, #tpu.memory_space<vmem>>, %arg5: memref<32x64xf32, #tpu.memory_space<vmem>>, %arg6: memref<1x32xf32, #tpu.memory_space<vmem>>, %arg7: memref<1x32xf32, #tpu.memory_space<vmem>>, %arg8: memref<1x8x32xf32, #tpu.memory_space<vmem>>, %arg9: memref<16x64xf32, #tpu.memory_space<vmem>>, %arg10: memref<8x32xf32, #tpu.memory_space<vmem>>) attributes {dimension_semantics = [#tpu.dimension_semantics<parallel>, #tpu.dimension_semantics<arbitrary>], iteration_bounds = array<i64: 2, 2>, scalar_prefetch = 0 : i64, scratch_operands = 2 : i64, tpu.core_type = #tpu.core_type<tc>, window_params = [{transform_indices = @transform_0, window_bounds = array<i64: 1, 16, 32>}, {transform_indices = @transform_1, window_bounds = array<i64: 1, 8, 32>}, {pipeline_mode = #tpu.pipeline_mode<synchronous>, transform_indices = @transform_2, window_bounds = array<i64: 32, 32>}, {pipeline_mode = #tpu.pipeline_mode<synchronous>, transform_indices = @transform_3, window_bounds = array<i64: 32, 64>}, {pipeline_mode = #tpu.pipeline_mode<synchronous>, transform_indices = @transform_4, window_bounds = array<i64: 1, 32>}, {pipeline_mode = #tpu.pipeline_mode<synchronous>, transform_indices = @transform_5, window_bounds = array<i64: 1, 32>}, {transform_indices = @transform_6, window_bounds = array<i64: 1, 8, 32>}]} {
    %c0 = arith.constant 0 : index
    %c0_0 = arith.constant 0 : index
    %0 = vector.load %arg6[%c0, %c0_0] : memref<1x32xf32, #tpu.memory_space<vmem>>, vector<1x32xf32>
    %c0_1 = arith.constant 0 : index
    %c0_2 = arith.constant 0 : index
    %1 = vector.load %arg7[%c0_1, %c0_2] : memref<1x32xf32, #tpu.memory_space<vmem>>, vector<1x32xf32>
    %c0_i32 = arith.constant 0 : i32
    %2 = arith.cmpi eq, %arg1, %c0_i32 : i32
    %3 = arith.extui %2 : i1 to i32
    %c0_i32_3 = arith.constant 0 : i32
    %4 = arith.cmpi ne, %3, %c0_i32_3 : i32
    scf.if %4 {
      %c0_52 = arith.constant 0 : index
      %c0_53 = arith.constant 0 : index
      %c0_54 = arith.constant 0 : index
      %98 = vector.load %arg2[%c0_52, %c0_53, %c0_54] : memref<1x16x32xf32, #tpu.memory_space<vmem>>, vector<1x16x32xf32>
      %99 = vector.shape_cast %98 : vector<1x16x32xf32> to vector<16x32xf32>
      %cst_55 = arith.constant dense<0.000000e+00> : vector<16xf32>
      %100 = vector.multi_reduction <add>, %99, %cst_55 [1] : vector<16x32xf32> to vector<16xf32>
      %101 = vector.shape_cast %100 : vector<16xf32> to vector<16x1xf32>
      %cst_56 = arith.constant 3.200000e+01 : f32
      %102 = vector.broadcast %cst_56 : f32 to vector<16x1xf32>
      %103 = arith.divf %101, %102 : vector<16x1xf32>
      %104 = vector.broadcast %103 : vector<16x1xf32> to vector<16x32xf32>
      %105 = arith.subf %99, %104 : vector<16x32xf32>
      %106 = arith.mulf %105, %105 : vector<16x32xf32>
      %cst_57 = arith.constant dense<0.000000e+00> : vector<16xf32>
      %107 = vector.multi_reduction <add>, %106, %cst_57 [1] : vector<16x32xf32> to vector<16xf32>
      %108 = vector.shape_cast %107 : vector<16xf32> to vector<16x1xf32>
      %cst_58 = arith.constant 3.200000e+01 : f32
      %109 = vector.broadcast %cst_58 : f32 to vector<16x1xf32>
      %110 = arith.divf %108, %109 : vector<16x1xf32>
      %cst_59 = arith.constant 9.99999974E-6 : f32
      %111 = vector.broadcast %cst_59 : f32 to vector<16x1xf32>
      %112 = arith.addf %110, %111 : vector<16x1xf32>
      %113 = math.rsqrt %112 : vector<16x1xf32>
      %114 = vector.broadcast %113 : vector<16x1xf32> to vector<16x32xf32>
      %115 = arith.mulf %105, %114 : vector<16x32xf32>
      %116 = vector.broadcast %0 : vector<1x32xf32> to vector<16x32xf32>
      %117 = arith.mulf %115, %116 : vector<16x32xf32>
      %118 = vector.broadcast %1 : vector<1x32xf32> to vector<16x32xf32>
      %119 = arith.addf %117, %118 : vector<16x32xf32>
      %c0_60 = arith.constant 0 : index
      %c0_61 = arith.constant 0 : index
      %120 = vector.load %arg5[%c0_60, %c0_61] : memref<32x64xf32, #tpu.memory_space<vmem>>, vector<32x64xf32>
      %cst_62 = arith.constant dense<0.000000e+00> : vector<16x64xf32>
      %121 = tpu.matmul %119, %120, %cst_62 {dimension_numbers = #tpu.dot_dimension_numbers<[1], [0], [0], [1], [0, 0, 1, 1], [], []>} : vector<16x32xf32>, vector<32x64xf32>, vector<16x64xf32> -> vector<16x64xf32>
      %c0_63 = arith.constant 0 : index
      %c0_64 = arith.constant 0 : index
      %122 = vector.load %arg9[%c0_63, %c0_64] : memref<16x64xf32, #tpu.memory_space<vmem>>, vector<16x64xf32>
      tpu.vector_store %arg9[%c0_63, %c0_64], %121 {strides = array<i32>} : memref<16x64xf32, #tpu.memory_space<vmem>>, vector<16x64xf32>,
    } else {
    }
    %c0_4 = arith.constant 0 : index
    %c0_5 = arith.constant 0 : index
    %c0_6 = arith.constant 0 : index
    %5 = vector.load %arg3[%c0_4, %c0_5, %c0_6] : memref<1x8x32xf32, #tpu.memory_space<vmem>>, vector<1x8x32xf32>
    %6 = vector.shape_cast %5 : vector<1x8x32xf32> to vector<8x32xf32>
    %cst = arith.constant dense<0.000000e+00> : vector<8xf32>
    %7 = vector.multi_reduction <add>, %6, %cst [1] : vector<8x32xf32> to vector<8xf32>
    %8 = vector.shape_cast %7 : vector<8xf32> to vector<8x1xf32>
    %cst_7 = arith.constant 3.200000e+01 : f32
    %9 = vector.broadcast %cst_7 : f32 to vector<8x1xf32>
    %10 = arith.divf %8, %9 : vector<8x1xf32>
    %11 = vector.broadcast %10 : vector<8x1xf32> to vector<8x32xf32>
    %12 = arith.subf %6, %11 : vector<8x32xf32>
    %13 = arith.mulf %12, %12 : vector<8x32xf32>
    %cst_8 = arith.constant dense<0.000000e+00> : vector<8xf32>
    %14 = vector.multi_reduction <add>, %13, %cst_8 [1] : vector<8x32xf32> to vector<8xf32>
    %15 = vector.shape_cast %14 : vector<8xf32> to vector<8x1xf32>
    %cst_9 = arith.constant 3.200000e+01 : f32
    %16 = vector.broadcast %cst_9 : f32 to vector<8x1xf32>
    %17 = arith.divf %15, %16 : vector<8x1xf32>
    %cst_10 = arith.constant 9.99999974E-6 : f32
    %18 = vector.broadcast %cst_10 : f32 to vector<8x1xf32>
    %19 = arith.addf %17, %18 : vector<8x1xf32>
    %20 = math.rsqrt %19 : vector<8x1xf32>
    %21 = vector.broadcast %20 : vector<8x1xf32> to vector<8x32xf32>
    %22 = arith.mulf %12, %21 : vector<8x32xf32>
    %23 = vector.broadcast %0 : vector<1x32xf32> to vector<8x32xf32>
    %24 = arith.mulf %22, %23 : vector<8x32xf32>
    %25 = vector.broadcast %1 : vector<1x32xf32> to vector<8x32xf32>
    %26 = arith.addf %24, %25 : vector<8x32xf32>
    %c0_11 = arith.constant 0 : index
    %c0_12 = arith.constant 0 : index
    %27 = vector.load %arg4[%c0_11, %c0_12] : memref<32x32xf32, #tpu.memory_space<vmem>>, vector<32x32xf32>
    %cst_13 = arith.constant dense<0.000000e+00> : vector<8x32xf32>
    %28 = tpu.matmul %26, %27, %cst_13 {dimension_numbers = #tpu.dot_dimension_numbers<[1], [0], [0], [1], [0, 0, 1, 1], [], []>} : vector<8x32xf32>, vector<32x32xf32>, vector<8x32xf32> -> vector<8x32xf32>
    %29 = vector.extract_strided_slice %28 {offsets = [0, 0], sizes = [8, 8], strides = [1, 1]} : vector<8x32xf32> to vector<8x8xf32>
    %c0_14 = arith.constant 0 : index
    %c0_15 = arith.constant 0 : index
    %30 = vector.load %arg9[%c0_14, %c0_15] : memref<16x64xf32, #tpu.memory_space<vmem>>, vector<16x8xf32>
    %c0_16 = arith.constant 0 : index
    %c32 = arith.constant 32 : index
    %31 = vector.load %arg9[%c0_16, %c32] : memref<16x64xf32, #tpu.memory_space<vmem>>, vector<16x8xf32>
    %cst_17 = arith.constant dense<0.000000e+00> : vector<8x16xf32>
    %32 = tpu.matmul %29, %30, %cst_17 {dimension_numbers = #tpu.dot_dimension_numbers<[1], [1], [0], [0], [0, 0, 1, 0], [], []>} : vector<8x8xf32>, vector<16x8xf32>, vector<8x16xf32> -> vector<8x16xf32>
    %cst_18 = arith.constant dense<0xFF800000> : vector<8xf32>
    %33 = vector.multi_reduction <maximumf>, %32, %cst_18 [1] : vector<8x16xf32> to vector<8xf32>
    %34 = vector.shape_cast %33 : vector<8xf32> to vector<8x1xf32>
    %35 = vector.broadcast %34 : vector<8x1xf32> to vector<8x16xf32>
    %36 = arith.subf %32, %35 : vector<8x16xf32>
    %37 = math.exp %36 : vector<8x16xf32>
    %cst_19 = arith.constant dense<0.000000e+00> : vector<8xf32>
    %38 = vector.multi_reduction <add>, %37, %cst_19 [1] : vector<8x16xf32> to vector<8xf32>
    %39 = vector.shape_cast %38 : vector<8xf32> to vector<8x1xf32>
    %cst_20 = arith.constant dense<0.000000e+00> : vector<8x8xf32>
    %40 = tpu.matmul %37, %31, %cst_20 {dimension_numbers = #tpu.dot_dimension_numbers<[1], [0], [0], [1], [0, 0, 1, 1], [], []>} : vector<8x16xf32>, vector<16x8xf32>, vector<8x8xf32> -> vector<8x8xf32>
    %41 = tpu.reciprocal %39 {approx = true} : vector<8x1xf32> -> vector<8x1xf32>
    %42 = vector.broadcast %41 : vector<8x1xf32> to vector<8x8xf32>
    %43 = arith.mulf %40, %42 : vector<8x8xf32>
    %c0_21 = arith.constant 0 : index
    %c0_22 = arith.constant 0 : index
    %44 = vector.load %arg10[%c0_21, %c0_22] : memref<8x32xf32, #tpu.memory_space<vmem>>, vector<8x8xf32>
    tpu.vector_store %arg10[%c0_21, %c0_22], %43 {strides = array<i32>} : memref<8x32xf32, #tpu.memory_space<vmem>>, vector<8x8xf32>,
    %45 = vector.extract_strided_slice %28 {offsets = [0, 8], sizes = [8, 8], strides = [1, 1]} : vector<8x32xf32> to vector<8x8xf32>
    %c0_23 = arith.constant 0 : index
    %c8 = arith.constant 8 : index
    %46 = vector.load %arg9[%c0_23, %c8] : memref<16x64xf32, #tpu.memory_space<vmem>>, vector<16x8xf32>
    %c0_24 = arith.constant 0 : index
    %c40 = arith.constant 40 : index
    %47 = vector.load %arg9[%c0_24, %c40] : memref<16x64xf32, #tpu.memory_space<vmem>>, vector<16x8xf32>
    %cst_25 = arith.constant dense<0.000000e+00> : vector<8x16xf32>
    %48 = tpu.matmul %45, %46, %cst_25 {dimension_numbers = #tpu.dot_dimension_numbers<[1], [1], [0], [0], [0, 0, 1, 0], [], []>} : vector<8x8xf32>, vector<16x8xf32>, vector<8x16xf32> -> vector<8x16xf32>
    %cst_26 = arith.constant dense<0xFF800000> : vector<8xf32>
    %49 = vector.multi_reduction <maximumf>, %48, %cst_26 [1] : vector<8x16xf32> to vector<8xf32>
    %50 = vector.shape_cast %49 : vector<8xf32> to vector<8x1xf32>
    %51 = vector.broadcast %50 : vector<8x1xf32> to vector<8x16xf32>
    %52 = arith.subf %48, %51 : vector<8x16xf32>
    %53 = math.exp %52 : vector<8x16xf32>
    %cst_27 = arith.constant dense<0.000000e+00> : vector<8xf32>
    %54 = vector.multi_reduction <add>, %53, %cst_27 [1] : vector<8x16xf32> to vector<8xf32>
    %55 = vector.shape_cast %54 : vector<8xf32> to vector<8x1xf32>
    %cst_28 = arith.constant dense<0.000000e+00> : vector<8x8xf32>
    %56 = tpu.matmul %53, %47, %cst_28 {dimension_numbers = #tpu.dot_dimension_numbers<[1], [0], [0], [1], [0, 0, 1, 1], [], []>} : vector<8x16xf32>, vector<16x8xf32>, vector<8x8xf32> -> vector<8x8xf32>
    %57 = tpu.reciprocal %55 {approx = true} : vector<8x1xf32> -> vector<8x1xf32>
    %58 = vector.broadcast %57 : vector<8x1xf32> to vector<8x8xf32>
    %59 = arith.mulf %56, %58 : vector<8x8xf32>
    %c0_29 = arith.constant 0 : index
    %c8_30 = arith.constant 8 : index
    %60 = vector.load %arg10[%c0_29, %c8_30] : memref<8x32xf32, #tpu.memory_space<vmem>>, vector<8x8xf32>
    tpu.vector_store %arg10[%c0_29, %c8_30], %59 {strides = array<i32>} : memref<8x32xf32, #tpu.memory_space<vmem>>, vector<8x8xf32>,
    %61 = vector.extract_strided_slice %28 {offsets = [0, 16], sizes = [8, 8], strides = [1, 1]} : vector<8x32xf32> to vector<8x8xf32>
    %c0_31 = arith.constant 0 : index
    %c16 = arith.constant 16 : index
    %62 = vector.load %arg9[%c0_31, %c16] : memref<16x64xf32, #tpu.memory_space<vmem>>, vector<16x8xf32>
    %c0_32 = arith.constant 0 : index
    %c48 = arith.constant 48 : index
    %63 = vector.load %arg9[%c0_32, %c48] : memref<16x64xf32, #tpu.memory_space<vmem>>, vector<16x8xf32>
    %cst_33 = arith.constant dense<0.000000e+00> : vector<8x16xf32>
    %64 = tpu.matmul %61, %62, %cst_33 {dimension_numbers = #tpu.dot_dimension_numbers<[1], [1], [0], [0], [0, 0, 1, 0], [], []>} : vector<8x8xf32>, vector<16x8xf32>, vector<8x16xf32> -> vector<8x16xf32>
    %cst_34 = arith.constant dense<0xFF800000> : vector<8xf32>
    %65 = vector.multi_reduction <maximumf>, %64, %cst_34 [1] : vector<8x16xf32> to vector<8xf32>
    %66 = vector.shape_cast %65 : vector<8xf32> to vector<8x1xf32>
    %67 = vector.broadcast %66 : vector<8x1xf32> to vector<8x16xf32>
    %68 = arith.subf %64, %67 : vector<8x16xf32>
    %69 = math.exp %68 : vector<8x16xf32>
    %cst_35 = arith.constant dense<0.000000e+00> : vector<8xf32>
    %70 = vector.multi_reduction <add>, %69, %cst_35 [1] : vector<8x16xf32> to vector<8xf32>
    %71 = vector.shape_cast %70 : vector<8xf32> to vector<8x1xf32>
    %cst_36 = arith.constant dense<0.000000e+00> : vector<8x8xf32>
    %72 = tpu.matmul %69, %63, %cst_36 {dimension_numbers = #tpu.dot_dimension_numbers<[1], [0], [0], [1], [0, 0, 1, 1], [], []>} : vector<8x16xf32>, vector<16x8xf32>, vector<8x8xf32> -> vector<8x8xf32>
    %73 = tpu.reciprocal %71 {approx = true} : vector<8x1xf32> -> vector<8x1xf32>
    %74 = vector.broadcast %73 : vector<8x1xf32> to vector<8x8xf32>
    %75 = arith.mulf %72, %74 : vector<8x8xf32>
    %c0_37 = arith.constant 0 : index
    %c16_38 = arith.constant 16 : index
    %76 = vector.load %arg10[%c0_37, %c16_38] : memref<8x32xf32, #tpu.memory_space<vmem>>, vector<8x8xf32>
    tpu.vector_store %arg10[%c0_37, %c16_38], %75 {strides = array<i32>} : memref<8x32xf32, #tpu.memory_space<vmem>>, vector<8x8xf32>,
    %77 = vector.extract_strided_slice %28 {offsets = [0, 24], sizes = [8, 8], strides = [1, 1]} : vector<8x32xf32> to vector<8x8xf32>
    %c0_39 = arith.constant 0 : index
    %c24 = arith.constant 24 : index
    %78 = vector.load %arg9[%c0_39, %c24] : memref<16x64xf32, #tpu.memory_space<vmem>>, vector<16x8xf32>
    %c0_40 = arith.constant 0 : index
    %c56 = arith.constant 56 : index
    %79 = vector.load %arg9[%c0_40, %c56] : memref<16x64xf32, #tpu.memory_space<vmem>>, vector<16x8xf32>
    %cst_41 = arith.constant dense<0.000000e+00> : vector<8x16xf32>
    %80 = tpu.matmul %77, %78, %cst_41 {dimension_numbers = #tpu.dot_dimension_numbers<[1], [1], [0], [0], [0, 0, 1, 0], [], []>} : vector<8x8xf32>, vector<16x8xf32>, vector<8x16xf32> -> vector<8x16xf32>
    %cst_42 = arith.constant dense<0xFF800000> : vector<8xf32>
    %81 = vector.multi_reduction <maximumf>, %80, %cst_42 [1] : vector<8x16xf32> to vector<8xf32>
    %82 = vector.shape_cast %81 : vector<8xf32> to vector<8x1xf32>
    %83 = vector.broadcast %82 : vector<8x1xf32> to vector<8x16xf32>
    %84 = arith.subf %80, %83 : vector<8x16xf32>
    %85 = math.exp %84 : vector<8x16xf32>
    %cst_43 = arith.constant dense<0.000000e+00> : vector<8xf32>
    %86 = vector.multi_reduction <add>, %85, %cst_43 [1] : vector<8x16xf32> to vector<8xf32>
    %87 = vector.shape_cast %86 : vector<8xf32> to vector<8x1xf32>
    %cst_44 = arith.constant dense<0.000000e+00> : vector<8x8xf32>
    %88 = tpu.matmul %85, %79, %cst_44 {dimension_numbers = #tpu.dot_dimension_numbers<[1], [0], [0], [1], [0, 0, 1, 1], [], []>} : vector<8x16xf32>, vector<16x8xf32>, vector<8x8xf32> -> vector<8x8xf32>
    %89 = tpu.reciprocal %87 {approx = true} : vector<8x1xf32> -> vector<8x1xf32>
    %90 = vector.broadcast %89 : vector<8x1xf32> to vector<8x8xf32>
    %91 = arith.mulf %88, %90 : vector<8x8xf32>
    %c0_45 = arith.constant 0 : index
    %c24_46 = arith.constant 24 : index
    %92 = vector.load %arg10[%c0_45, %c24_46] : memref<8x32xf32, #tpu.memory_space<vmem>>, vector<8x8xf32>
    tpu.vector_store %arg10[%c0_45, %c24_46], %91 {strides = array<i32>} : memref<8x32xf32, #tpu.memory_space<vmem>>, vector<8x8xf32>,
    %c0_47 = arith.constant 0 : index
    %c0_48 = arith.constant 0 : index
    %93 = vector.load %arg10[%c0_47, %c0_48] : memref<8x32xf32, #tpu.memory_space<vmem>>, vector<8x32xf32>
    %94 = arith.addf %93, %26 : vector<8x32xf32>
    %c0_49 = arith.constant 0 : index
    %c0_50 = arith.constant 0 : index
    %c0_51 = arith.constant 0 : index
    %95 = vector.load %arg8[%c0_49, %c0_50, %c0_51] : memref<1x8x32xf32, #tpu.memory_space<vmem>>, vector<1x8x32xf32>
    %96 = vector.shape_cast %95 : vector<1x8x32xf32> to vector<8x32xf32>
    %97 = vector.shape_cast %94 : vector<8x32xf32> to vector<1x8x32xf32>
    tpu.vector_store %arg8[%c0_49, %c0_50, %c0_51], %97 {strides = array<i32>} : memref<1x8x32xf32, #tpu.memory_space<vmem>>, vector<1x8x32xf32>,
    return
  }
  func.func @transform_0(%arg0: i32, %arg1: i32) -> (i32, i32, i32) {
    %c0_i32 = arith.constant 0 : i32
    %c0_i32_0 = arith.constant 0 : i32
    %c0_i32_1 = arith.constant 0 : i32
    return %arg0, %c0_i32, %c0_i32_0 : i32, i32, i32
  }
  func.func @transform_1(%arg0: i32, %arg1: i32) -> (i32, i32, i32) {
    %c0_i32 = arith.constant 0 : i32
    %c0_i32_0 = arith.constant 0 : i32
    return %arg0, %arg1, %c0_i32 : i32, i32, i32
  }
  func.func @transform_2(%arg0: i32, %arg1: i32) -> (i32, i32) {
    %c0_i32 = arith.constant 0 : i32
    %c0_i32_0 = arith.constant 0 : i32
    %c0_i32_1 = arith.constant 0 : i32
    return %c0_i32, %c0_i32_0 : i32, i32
  }
  func.func @transform_3(%arg0: i32, %arg1: i32) -> (i32, i32) {
    %c0_i32 = arith.constant 0 : i32
    %c0_i32_0 = arith.constant 0 : i32
    %c0_i32_1 = arith.constant 0 : i32
    return %c0_i32, %c0_i32_0 : i32, i32
  }
  func.func @transform_4(%arg0: i32, %arg1: i32) -> (i32, i32) {
    %c0_i32 = arith.constant 0 : i32
    %c0_i32_0 = arith.constant 0 : i32
    %c0_i32_1 = arith.constant 0 : i32
    return %c0_i32, %c0_i32_0 : i32, i32
  }
  func.func @transform_5(%arg0: i32, %arg1: i32) -> (i32, i32) {
    %c0_i32 = arith.constant 0 : i32
    %c0_i32_0 = arith.constant 0 : i32
    %c0_i32_1 = arith.constant 0 : i32
    return %c0_i32, %c0_i32_0 : i32, i32
  }
  func.func @transform_6(%arg0: i32, %arg1: i32) -> (i32, i32, i32) {
    %c0_i32 = arith.constant 0 : i32
    %c0_i32_0 = arith.constant 0 : i32
    return %arg0, %arg1, %c0_i32 : i32, i32, i32
  }
}

</mosaic_0001>

<llo_original>
// kernel: tpu_custom_call.1
$region0: #{tpu_custom_call.1}
  #allocation0 [shape = 'u32[]', space=smem, size = 0x4, offset = 0x4, fixed_abs, tag = 'smem constant byte address 0x4 - core index']
  #allocation1 [shape = 'u32[144,128]{1,0:T(1,128)}', space=vmem, size = 0x12000, scoped, tag = 'internal scratch']
  #allocation2 [shape = 'f32[16,64]{1,0:T(8,128)}', space=vmem, size = 0x2000, scoped, tag = 'scratch operand']
  #allocation3 [shape = 'f32[8,32]{1,0:T(8,128)}', space=vmem, size = 0x1000, scoped, tag = 'scratch operand']
  %s0 = inlined_call_operand.hbm [shape: f32[2,16,32], index: 0, kind: input, shape index: {}]
  %s1 = inlined_call_operand.hbm [shape: f32[2,16,32], index: 1, kind: input, shape index: {}]
  %s2 = inlined_call_operand.hbm [shape: f32[32,32], index: 2, kind: input, shape index: {}]
  %s3 = inlined_call_operand.hbm [shape: f32[32,64], index: 3, kind: input, shape index: {}]
  %s4 = inlined_call_operand.vmem [shape: f32[1,32], index: 4, kind: input, shape index: {}]
  %s5 = inlined_call_operand.vmem [shape: f32[1,32], index: 5, kind: input, shape index: {}]
  %s6 = inlined_call_operand.hbm [shape: f32[2,16,32], index: 6, kind: output, shape index: {}]
  %s7 = sld [smem:[#allocation0]]
  $region77: #{tpu_custom_call.1} parent=0
    _
  %s9 = ssub.s32 1, %s7
  %s10 = scalar_select 0, %s9, %s7
  $region1: #{tpu_custom_call.1} parent=0
    #allocation4 [shape = 'u8[16384]{0}', space=vmem, size = 0x4000, scoped, tag = 'input window, operand 0']
    #allocation5 [shape = 's32[2]{0}', space=sflag, size = 0x8, scoped, tag = 'scoped memory for tpu_custom_call.1']
    #allocation6 [shape = 's32[2]{0}', space=sflag, size = 0x8, scoped, tag = 'scoped memory for tpu_custom_call.1']
    #allocation7 [shape = 'u8[8192]{0}', space=vmem, size = 0x2000, scoped, tag = 'input window, operand 1']
    #allocation8 [shape = 's32[2]{0}', space=sflag, size = 0x8, scoped, tag = 'scoped memory for tpu_custom_call.1']
    #allocation9 [shape = 'u8[16384]{0}', space=vmem, size = 0x4000, scoped, tag = 'input window, operand 2, single buffered']
    #allocation10 [shape = 'u8[16384]{0}', space=vmem, size = 0x4000, scoped, tag = 'input window, operand 3, single buffered']
    #allocation11 [shape = 's32[1]{0}', space=sflag, size = 0x4, scoped, tag = 'scoped memory for tpu_custom_call.1']
    #allocation12 [shape = 'u8[8192]{0}', space=vmem, size = 0x2000, scoped, tag = 'output window, operand 0']
    %11 = vsyncpa [#allocation5], 0
    %s12 = scalar_lea.sflag [#allocation5], 1
    %13 = vsyncpa %s12, 0
    %14 = vsyncpa [#allocation8], 0
    %s15 = scalar_lea.sflag [#allocation8], 1
    %16 = vsyncpa %s15, 0
    %17 = vsyncpa [#allocation11], 0
    %18 = vsyncpa [#allocation6], 0
    %s19 = scalar_lea.sflag [#allocation6], 1
    %20 = vsyncpa %s19, 0
    loop: start=0, step=1, limit=6
    $region2: #{tpu_custom_call.1} parent=1 // loop_pre_header
      _
    $region3: #{tpu_custom_call.1} parent=1 // loop_header
      %s22 = sphi 0, %s26
      %p23 = scmp.ge.s32.totalorder %s22, 6
      %s29 = sphi 0, %s41
      %s30 = sphi 0, %s37
      %s31 = sphi 0, %s29
      %s32 = sphi 0, %s30
      %s33 = sphi 0, %s31
      %s34 = sphi 0, %s32
      %s44 = sphi 0, %s46
      %s47 = sphi 0, %s44
      %s48 = sphi 0, %s47
      %s64 = sphi 0, %s48
      %s72 = sphi 0, %s74
      %s75 = sphi 0, %s72
      %s76 = sphi 0, %s75
      %s92 = sphi 0, %s76
      %s96 = sphi 0, %s96
      %s98 = sphi 0, %s96
      %s99 = sphi 0, %s98
      %s113 = sphi 0, %s99
      %s117 = sphi 0, %s117
      %s119 = sphi 0, %s117
      %s120 = sphi 0, %s119
      %s134 = sphi 0, %s120
      %s138 = sphi 0, %s138
      %s140 = sphi 0, %s138
      %s141 = sphi 0, %s140
      %s155 = sphi 0, %s141
      %s159 = sphi 0, %s159
      %s161 = sphi 0, %s159
      %s162 = sphi 0, %s161
      %s176 = sphi 0, %s162
      %s184 = sphi 0, %s186
      %s187 = sphi 0, %s184
      %s188 = sphi 0, %s187
      %s204 = sphi 0, %s188
    $region4: #{tpu_custom_call.1} parent=1 // loop_header_branch
      %25 = sbr.rel (%p23) target = $region8
    $region5: #{tpu_custom_call.1} parent=1 // loop_body
      %s27 = ssub.s32 %s22, 1
      %s28 = ssub.s32 %s22, 2
      %s35 = sadd.s32 1, %s30
      %p36 = scmp.ge.s32.totalorder %s35, 2
      %s37 = scalar_select %p36, 0, %s35
      %s38 = sadd.s32 1, %s29
      %s39 = scalar_select %p36, %s38, %s29
      %p40 = scmp.ge.s32.totalorder %s39, 2
      %s41 = scalar_select %p40, 0, %s39
      %s42 = ssub.s32 %s29, %s41
      %p43 = scmp.eq.s32.totalorder %s42, 0
      %s45 = sadd.s32 %s44, 1
      %s46 = scalar_select %p43, %s44, %s45
      %p49 = pneg %p43
      %p50 = scmp.eq.s32.totalorder %s22, 3
      %p51 = por %p49, %p50
      %p52 = scmp.ne.s32.totalorder %s44, %s47
      %p53 = scmp.eq.s32.totalorder %s22, 0
      %p54 = por %p52, %p53
      %p55 = scmp.ne.s32.totalorder %s44, %s47
      %p56 = scmp.eq.s32.totalorder %s27, 3
      %p57 = por %p55, %p56
      %p58 = scmp.ne.s32.totalorder %s47, %s48
      %p59 = scmp.eq.s32.totalorder %s27, 0
      %p60 = por %p58, %p59
      %p61 = scmp.ne.s32.totalorder %s47, %s48
      %p62 = scmp.eq.s32.totalorder %s28, 3
      %p63 = por %p61, %p62
      %p65 = scmp.ne.s32.totalorder %s48, %s64
      %p66 = scmp.eq.s32.totalorder %s28, 0
      %p67 = por %p65, %p66
      %s68 = ssub.s32 %s29, %s41
      %s69 = ssub.s32 %s30, %s37
      %s70 = sor.u32 %s68, %s69
      %p71 = scmp.eq.s32.totalorder %s70, 0
      %s73 = sadd.s32 %s72, 1
      %s74 = scalar_select %p71, %s72, %s73
      %p77 = pneg %p71
      %p78 = scmp.eq.s32.totalorder %s22, 3
      %p79 = por %p77, %p78
      %p80 = scmp.ne.s32.totalorder %s72, %s75
      %p81 = scmp.eq.s32.totalorder %s22, 0
      %p82 = por %p80, %p81
      %p83 = scmp.ne.s32.totalorder %s72, %s75
      %p84 = scmp.eq.s32.totalorder %s27, 3
      %p85 = por %p83, %p84
      %p86 = scmp.ne.s32.totalorder %s75, %s76
      %p87 = scmp.eq.s32.totalorder %s27, 0
      %p88 = por %p86, %p87
      %p89 = scmp.ne.s32.totalorder %s75, %s76
      %p90 = scmp.eq.s32.totalorder %s28, 3
      %p91 = por %p89, %p90
      %p93 = scmp.ne.s32.totalorder %s76, %s92
      %p94 = scmp.eq.s32.totalorder %s28, 0
      %p95 = por %p93, %p94
      %s97 = sadd.s32 %s96, 1
      %p100 = scmp.eq.s32.totalorder %s22, 3
      %p101 = scmp.ne.s32.totalorder %s96, %s98
      %p102 = scmp.eq.s32.totalorder %s22, 0
      %p103 = por %p101, %p102
      %p104 = scmp.ne.s32.totalorder %s96, %s98
      %p105 = scmp.eq.s32.totalorder %s27, 3
      %p106 = por %p104, %p105
      %p107 = scmp.ne.s32.totalorder %s98, %s99
      %p108 = scmp.eq.s32.totalorder %s27, 0
      %p109 = por %p107, %p108
      %p110 = scmp.ne.s32.totalorder %s98, %s99
      %p111 = scmp.eq.s32.totalorder %s28, 3
      %p112 = por %p110, %p111
      %p114 = scmp.ne.s32.totalorder %s99, %s113
      %p115 = scmp.eq.s32.totalorder %s28, 0
      %p116 = por %p114, %p115
      %s118 = sadd.s32 %s117, 1
      %p121 = scmp.eq.s32.totalorder %s22, 3
      %p122 = scmp.ne.s32.totalorder %s117, %s119
      %p123 = scmp.eq.s32.totalorder %s22, 0
      %p124 = por %p122, %p123
      %p125 = scmp.ne.s32.totalorder %s117, %s119
      %p126 = scmp.eq.s32.totalorder %s27, 3
      %p127 = por %p125, %p126
      %p128 = scmp.ne.s32.totalorder %s119, %s120
      %p129 = scmp.eq.s32.totalorder %s27, 0
      %p130 = por %p128, %p129
      %p131 = scmp.ne.s32.totalorder %s119, %s120
      %p132 = scmp.eq.s32.totalorder %s28, 3
      %p133 = por %p131, %p132
      %p135 = scmp.ne.s32.totalorder %s120, %s134
      %p136 = scmp.eq.s32.totalorder %s28, 0
      %p137 = por %p135, %p136
      %s139 = sadd.s32 %s138, 1
      %p142 = scmp.eq.s32.totalorder %s22, 3
      %p143 = scmp.ne.s32.totalorder %s138, %s140
      %p144 = scmp.eq.s32.totalorder %s22, 0
      %p145 = por %p143, %p144
      %p146 = scmp.ne.s32.totalorder %s138, %s140
      %p147 = scmp.eq.s32.totalorder %s27, 3
      %p148 = por %p146, %p147
      %p149 = scmp.ne.s32.totalorder %s140, %s141
      %p150 = scmp.eq.s32.totalorder %s27, 0
      %p151 = por %p149, %p150
      %p152 = scmp.ne.s32.totalorder %s140, %s141
      %p153 = scmp.eq.s32.totalorder %s28, 3
      %p154 = por %p152, %p153
      %p156 = scmp.ne.s32.totalorder %s141, %s155
      %p157 = scmp.eq.s32.totalorder %s28, 0
      %p158 = por %p156, %p157
      %s160 = sadd.s32 %s159, 1
      %p163 = scmp.eq.s32.totalorder %s22, 3
      %p164 = scmp.ne.s32.totalorder %s159, %s161
      %p165 = scmp.eq.s32.totalorder %s22, 0
      %p166 = por %p164, %p165
      %p167 = scmp.ne.s32.totalorder %s159, %s161
      %p168 = scmp.eq.s32.totalorder %s27, 3
      %p169 = por %p167, %p168
      %p170 = scmp.ne.s32.totalorder %s161, %s162
      %p171 = scmp.eq.s32.totalorder %s27, 0
      %p172 = por %p170, %p171
      %p173 = scmp.ne.s32.totalorder %s161, %s162
      %p174 = scmp.eq.s32.totalorder %s28, 3
      %p175 = por %p173, %p174
      %p177 = scmp.ne.s32.totalorder %s162, %s176
      %p178 = scmp.eq.s32.totalorder %s28, 0
      %p179 = por %p177, %p178
      %s180 = ssub.s32 %s29, %s41
      %s181 = ssub.s32 %s30, %s37
      %s182 = sor.u32 %s180, %s181
      %p183 = scmp.eq.s32.totalorder %s182, 0
      %s185 = sadd.s32 %s184, 1
      %s186 = scalar_select %p183, %s184, %s185
      %p189 = pneg %p183
      %p190 = scmp.eq.s32.totalorder %s22, 3
      %p191 = por %p189, %p190
      %p192 = scmp.ne.s32.totalorder %s184, %s187
      %p193 = scmp.eq.s32.totalorder %s22, 0
      %p194 = por %p192, %p193
      %p195 = scmp.ne.s32.totalorder %s184, %s187
      %p196 = scmp.eq.s32.totalorder %s27, 3
      %p197 = por %p195, %p196
      %p198 = scmp.ne.s32.totalorder %s187, %s188
      %p199 = scmp.eq.s32.totalorder %s27, 0
      %p200 = por %p198, %p199
      %p201 = scmp.ne.s32.totalorder %s187, %s188
      %p202 = scmp.eq.s32.totalorder %s28, 3
      %p203 = por %p201, %p202
      %p205 = scmp.ne.s32.totalorder %s188, %s204
      %p206 = scmp.eq.s32.totalorder %s28, 0
      %p207 = por %p205, %p206
      %p208 = scmp.le.s32.totalorder 1, %s22
      %p209 = scmp.lt.s32.totalorder %s22, 5
      %p210 = pnand %p208, %p209
      %p211 = pneg %p210
      // Predicated region
      $region9: #{tpu_custom_call.1} parent=5 // pred_check
        _
      $region10: #{tpu_custom_call.1} parent=5 // pred_check_branch
        %213 = sbr.rel (%p210) target = $region12
      $region11: #{tpu_custom_call.1} parent=5 // pred_region
        %s214 = ssub.s32 %s22, 1
        // Predicated region
        $region13: #{tpu_custom_call.1} parent=11 // pred_check
          %p215 = pneg %p109
        $region14: #{tpu_custom_call.1} parent=11 // pred_check_branch
          %217 = sbr.rel (%p215) target = $region16
        $region15: #{tpu_custom_call.1} parent=11 // pred_region
          %s219 = ssub.s32 512, 512
          %220 = vsyncadd [#allocation8], %s219
          %s221 = sshll.u32 [#allocation9], 4
          %s222 = int_to_ptr.vmem [resolvable:$true] %s221
          %227 = dma.hbm_to_vmem [thread:$0]  %s2, 512, %s222, [#allocation8], 128, 128, 8
        $region16: #{tpu_custom_call.1} parent=11 // pred_fallthru
          _
        // Predicated region
        $region17: #{tpu_custom_call.1} parent=11 // pred_check
          %p228 = pneg %p130
        $region18: #{tpu_custom_call.1} parent=11 // pred_check_branch
          %230 = sbr.rel (%p228) target = $region20
        $region19: #{tpu_custom_call.1} parent=11 // pred_region
          %s232 = ssub.s32 512, 512
          %233 = vsyncadd [#allocation11], %s232
          %s234 = sshll.u32 [#allocation10], 4
          %s235 = int_to_ptr.vmem [resolvable:$true] %s234
          %240 = dma.hbm_to_vmem [thread:$0]  %s3, 512, %s235, [#allocation11], 128, 128, 8
        $region20: #{tpu_custom_call.1} parent=11 // pred_fallthru
          _
        // Predicated region
        $region21: #{tpu_custom_call.1} parent=11 // pred_check
          %p241 = pneg %p151
        $region22: #{tpu_custom_call.1} parent=11 // pred_check_branch
          %243 = sbr.rel (%p241) target = $region24
        $region23: #{tpu_custom_call.1} parent=11 // pred_region
          _
        $region24: #{tpu_custom_call.1} parent=11 // pred_fallthru
          _
        // Predicated region
        $region25: #{tpu_custom_call.1} parent=11 // pred_check
          %p244 = pneg %p172
        $region26: #{tpu_custom_call.1} parent=11 // pred_check_branch
          %246 = sbr.rel (%p244) target = $region28
        $region27: #{tpu_custom_call.1} parent=11 // pred_region
          _
        $region28: #{tpu_custom_call.1} parent=11 // pred_fallthru
          _
      $region12: #{tpu_custom_call.1} parent=5 // pred_fallthru
        _
      %p247 = scmp.lt.s32.totalorder %s22, 4
      // Predicated region
      $region29: #{tpu_custom_call.1} parent=5 // pred_check
        %p248 = pneg %p247
      $region30: #{tpu_custom_call.1} parent=5 // pred_check_branch
        %250 = sbr.rel (%p248) target = $region32
      $region31: #{tpu_custom_call.1} parent=5 // pred_region
        // Predicated region
        $region33: #{tpu_custom_call.1} parent=31 // pred_check
          %p251 = pneg %p54
        $region34: #{tpu_custom_call.1} parent=31 // pred_check_branch
          %253 = sbr.rel (%p251) target = $region36
        $region35: #{tpu_custom_call.1} parent=31 // pred_region
          %s254 = sand.u32 %s44, 1
          %s255 = scalar_lea.sflag [#allocation5], %s254
          %s256 = sand.u32 %s44, 1
          %s257 = smul.addr %s256, 16
          %s258 = scalar_lea.vmem [#allocation4], %s257
          %s260 = ssub.s32 256, 256
          %261 = vsyncadd %s255, %s260
          %s262 = smul.addr %s29, 2
          %s263 = smul.addr %s262, 128
          %s264 = scalar_lea.hbm %s0, %s263
          %s265 = sshll.u32 %s258, 4
          %s266 = int_to_ptr.vmem [resolvable:$true] %s265
          %271 = dma.hbm_to_vmem [thread:$0]  %s264, 256, %s266, %s255, 128, 128, 8
        $region36: #{tpu_custom_call.1} parent=31 // pred_fallthru
          _
        // Predicated region
        $region37: #{tpu_custom_call.1} parent=31 // pred_check
          %p272 = pneg %p82
        $region38: #{tpu_custom_call.1} parent=31 // pred_check_branch
          %274 = sbr.rel (%p272) target = $region40
        $region39: #{tpu_custom_call.1} parent=31 // pred_region
          %s275 = sand.u32 %s22, 1
          %s276 = scalar_lea.sflag [#allocation8], %s275
          %s277 = sand.u32 %s72, 1
          %s278 = smul.addr %s277, 8
          %s279 = scalar_lea.vmem [#allocation7], %s278
          %s281 = ssub.s32 128, 128
          %282 = vsyncadd %s276, %s281
          %s283 = smul.addr %s29, 2
          %s284 = sadd.s32 %s30, %s283
          %s285 = smul.addr %s284, 128
          %s286 = scalar_lea.hbm %s1, %s285
          %s288 = sshll.u32 %s279, 4
          %s289 = int_to_ptr.vmem [resolvable:$true] %s288
          %291 = dma.hbm_to_vmem [thread:$0]  %s286, 128, %s289, %s276
        $region40: #{tpu_custom_call.1} parent=31 // pred_fallthru
          _
      $region32: #{tpu_custom_call.1} parent=5 // pred_fallthru
        _
      %p292 = scmp.le.s32.totalorder 1, %s22
      %p293 = scmp.lt.s32.totalorder %s22, 5
      %p294 = pnand %p292, %p293
      %p295 = pneg %p294
      // Predicated region
      $region41: #{tpu_custom_call.1} parent=5 // pred_check
        _
      $region42: #{tpu_custom_call.1} parent=5 // pred_check_branch
        %297 = sbr.rel (%p294) target = $region44
      $region43: #{tpu_custom_call.1} parent=5 // pred_region
        %s298 = ssub.s32 %s22, 1
        %s299 = sand.u32 %s47, 1
        %s300 = scalar_lea.sflag [#allocation5], %s299
        %s301 = sand.u32 %s47, 1
        %s302 = smul.addr %s301, 16
        %s303 = scalar_lea.vmem [#allocation4], %s302
        // Predicated region
        $region45: #{tpu_custom_call.1} parent=43 // pred_check
          %p304 = pneg %p60
        $region46: #{tpu_custom_call.1} parent=43 // pred_check_branch
          %306 = sbr.rel (%p304) target = $region48
        $region47: #{tpu_custom_call.1} parent=43 // pred_region
          %307 = dma.done %s300, 256
        $region48: #{tpu_custom_call.1} parent=43 // pred_fallthru
          _
        %s308 = sand.u32 %s27, 1
        %s309 = scalar_lea.sflag [#allocation8], %s308
        %s310 = sand.u32 %s75, 1
        %s311 = smul.addr %s310, 8
        %s312 = scalar_lea.vmem [#allocation7], %s311
        // Predicated region
        $region49: #{tpu_custom_call.1} parent=43 // pred_check
          %p313 = pneg %p88
        $region50: #{tpu_custom_call.1} parent=43 // pred_check_branch
          %315 = sbr.rel (%p313) target = $region52
        $region51: #{tpu_custom_call.1} parent=43 // pred_region
          %316 = dma.done %s309, 128
        $region52: #{tpu_custom_call.1} parent=43 // pred_fallthru
          _
        // Predicated region
        $region53: #{tpu_custom_call.1} parent=43 // pred_check
          %p317 = pneg %p109
        $region54: #{tpu_custom_call.1} parent=43 // pred_check_branch
          %319 = sbr.rel (%p317) target = $region56
        $region55: #{tpu_custom_call.1} parent=43 // pred_region
          %320 = dma.done [#allocation8], 512
        $region56: #{tpu_custom_call.1} parent=43 // pred_fallthru
          _
        // Predicated region
        $region57: #{tpu_custom_call.1} parent=43 // pred_check
          %p321 = pneg %p130
        $region58: #{tpu_custom_call.1} parent=43 // pred_check_branch
          %323 = sbr.rel (%p321) target = $region60
        $region59: #{tpu_custom_call.1} parent=43 // pred_region
          %324 = dma.done [#allocation11], 512
        $region60: #{tpu_custom_call.1} parent=43 // pred_fallthru
          _
        %s325 = sand.u32 %s47, 1
        %s326 = scalar_lea.sflag [#allocation5], %s325
        %s327 = sand.u32 %s47, 1
        %s328 = smul.addr %s327, 16
        %s329 = scalar_lea.vmem [#allocation4], %s328
        %p330 = pneg %p60
        %p331 = pneg %p57
        %s332 = sand.u32 %s27, 1
        %s333 = scalar_lea.sflag [#allocation8], %s332
        %s334 = sand.u32 %s75, 1
        %s335 = smul.addr %s334, 8
        %s336 = scalar_lea.vmem [#allocation7], %s335
        %p337 = pneg %p88
        %p338 = pneg %p85
        %p339 = pneg %p109
        %p340 = pneg %p106
        %p341 = pneg %p130
        %p342 = pneg %p127
        %p343 = pneg %p151
        %p344 = pneg %p148
        %p345 = pneg %p172
        %p346 = pneg %p169
        %p347 = pneg %p200
        %p348 = pneg %p197
        %s349 = sand.u32 %s187, 1
        %s350 = scalar_lea.sflag [#allocation6], %s349
        %s351 = sand.u32 %s187, 1
        %s352 = smul.addr %s351, 8
        %s353 = scalar_lea.vmem [#allocation12], %s352
        %v354 = vld [vmem:[%s4] sm:$0x1]
        %v355 = vld [vmem:[%s5] sm:$0x1]
        %p356 = scmp.eq.s32.totalorder %s32, 0
        // Predicated region
        $region61: #{tpu_custom_call.1} parent=43 // pred_check
          %p357 = pneg %p356
        $region62: #{tpu_custom_call.1} parent=43 // pred_check_branch
          %359 = sbr.rel (%p357) target = $region64
        $region63: #{tpu_custom_call.1} parent=43 // pred_region
          %v360 = vld [vmem:[%s303] sm:$0xff]
          %v361 = vld [vmem:[%s303 + $0x8] sm:$0xff]
          %vm362 = vcmask 261120
          %v363 = vsel %vm362, %v360, 0.0
          %364 = vadd.xlane.f32.xlu0 %v363
          %v365 = vpop.xlane.xlu0 %364
          %v366 = vsel %vm362, %v361, 0.0
          %367 = vadd.xlane.f32.xlu0 %v366
          %v368 = vpop.xlane.xlu0 %367
          %v369 = vrcp.pop 32.0
          %v370 = vmul.f32 %v365, %v369
          %v371 = vmul.f32 %v368, %v369
          %v372 = vsub.f32 %v360, %v370
          %v373 = vsub.f32 %v361, %v371
          %v374 = vmul.f32 %v372, %v372
          %v375 = vmul.f32 %v373, %v373
          %v376 = vsel %vm362, %v374, 0.0
          %377 = vadd.xlane.f32.xlu0 %v376
          %v378 = vpop.xlane.xlu0 %377
          %v379 = vsel %vm362, %v375, 0.0
          %380 = vadd.xlane.f32.xlu0 %v379
          %v381 = vpop.xlane.xlu0 %380
          %v382 = vmul.f32 %v378, %v369
          %v383 = vmul.f32 %v381, %v369
          %v384 = vadd.f32 %v382, 1e-05
          %v385 = vadd.f32 %v383, 1e-05
          %v386 = vrsqrt.pop %v384
          %v387 = vrsqrt.pop %v385
          %v388 = vmul.f32 %v372, %v386
          %v389 = vmul.f32 %v373, %v387
          %v391 = vlaneseq
          %v392 = vshrl.u32 %v391, 7
          %v393 = vsub.s32 0, %v392
          %v394 = vrot.slane %v354, %v393
          %v396 = vmul.f32 %v388, %v394
          %v397 = vmul.f32 %v389, %v394
          %v399 = vlaneseq
          %v400 = vshrl.u32 %v399, 7
          %v401 = vsub.s32 0, %v400
          %v402 = vrot.slane %v355, %v401
          %v404 = vadd.f32 %v396, %v402
          %v405 = vadd.f32 %v397, %v402
          %v406 = vld [vmem:[#allocation10] sm:$0xff]
          %v407 = vld [vmem:[#allocation10 + $0x8] sm:$0xff]
          %v408 = vld [vmem:[#allocation10 + $0x10] sm:$0xff]
          %v409 = vld [vmem:[#allocation10 + $0x18] sm:$0xff]
          %v411 = vsel %vm362, %v404, 0
          %v414 = vsel %vm362, %v405, 0
          %416 = vmatprep.subr.mxu0 0.0
          %417 = vmatpush1.msra.mxu0 %v406
          %418 = vmatprep.subr.mxu0 0.0
          %419 = vmatpush1.msra.mxu0 %v407
          %420 = vmatprep.subr.mxu0 0.0
          %421 = vmatpush1.msra.mxu0 %v408
          %422 = vmatprep.subr.mxu0 0.0
          %423 = vmatpush1.msra.mxu0 %v409
          %424 = vmatprep.subr.mxu0 0.0
          %425 = vmatpush1.msra.mxu0 0.0
          %426 = vmatprep.subr.mxu0 0.0
          %427 = vmatpush1.msra.mxu0 0.0
          %428 = vmatprep.subr.mxu0 0.0
          %429 = vmatpush1.msra.mxu0 0.0
          %430 = vmatprep.subr.mxu0 0.0
          %431 = vmatpush1.msra.mxu0 0.0
          %432 = vmatprep.subr.mxu0 0.0
          %433 = vmatpush1.msra.mxu0 0.0
          %434 = vmatprep.subr.mxu0 0.0
          %435 = vmatpush1.msra.mxu0 0.0
          %436 = vmatprep.subr.mxu0 0.0
          %437 = vmatpush1.msra.mxu0 0.0
          %438 = vmatprep.subr.mxu0 0.0
          %439 = vmatpush1.msra.mxu0 0.0
          %440 = vmatprep.subr.mxu0 0.0
          %441 = vmatpush1.msra.mxu0 0.0
          %442 = vmatprep.subr.mxu0 0.0
          %443 = vmatpush1.msra.mxu0 0.0
          %444 = vmatprep.subr.mxu0 0.0
          %445 = vmatpush1.msra.mxu0 0.0
          %446 = vmatprep.subr.mxu0 0.0
          %447 = vmatpush1.msra.mxu0 0.0
          %448 = vmatprep.subr.mxu0 0.0
          %449 = vmatpush1.msra.mxu0 0.0
          %450 = vmatprep.subr.mxu0 0.0
          %451 = vmatpush1.msra.mxu0 0.0
          %452 = vmatprep.subr.mxu0 0.0
          %453 = vmatpush1.msra.mxu0 0.0
          %454 = vmatprep.subr.mxu0 0.0
          %455 = vmatpush1.msra.mxu0 0.0
          %456 = vmatprep.subr.mxu0 0.0
          %457 = vmatpush1.msra.mxu0 0.0
          %458 = vmatprep.subr.mxu0 0.0
          %459 = vmatpush1.msra.mxu0 0.0
          %460 = vmatprep.subr.mxu0 0.0
          %461 = vmatpush1.msra.mxu0 0.0
          %462 = vmatprep.subr.mxu0 0.0
          %463 = vmatpush1.msra.mxu0 0.0
          %464 = vmatprep.subr.mxu0 0.0
          %465 = vmatpush1.msra.mxu0 0.0
          %466 = vmatprep.subr.mxu0 0.0
          %467 = vmatpush1.msra.mxu0 0.0
          %468 = vmatprep.subr.mxu0 0.0
          %469 = vmatpush1.msra.mxu0 0.0
          %470 = vmatprep.subr.mxu0 0.0
          %471 = vmatpush1.msra.mxu0 0.0
          %472 = vmatprep.subr.mxu0 0.0
          %473 = vmatpush1.msra.mxu0 0.0
          %474 = vmatprep.subr.mxu0 0.0
          %475 = vmatpush1.msra.mxu0 0.0
          %476 = vmatprep.subr.mxu0 0.0
          %477 = vmatpush1.msra.mxu0 0.0
          %478 = vmatprep.subr.mxu0 0.0
          %479 = vmatpush1.msra.mxu0 0.0
          %480 = vmatprep.mubr.f32.mxu0 0.0
          %481 = vmatmul.mubr.f32.gmra.mrb[0].mxu0 %v411
          %v482 = vpop.f32.mrb[0].mxu0
          %v483 = vadd.f32 0.0, %v482
          %v484 = vpop.f32.mrb[0].mxu0
          %485 = vmatprep.mubr.f32.mxu0 0.0
          %486 = vmatmul.mubr.f32.gmra.mrb[0].mxu0 %v414
          %v487 = vpop.f32.mrb[0].mxu0
          %v488 = vadd.f32 0.0, %v487
          %v489 = vpop.f32.mrb[0].mxu0
          %490 = vdwg.mxu0
          %vm491 = vcmask 523264
          %492 = vst.msk [vmem:[#allocation2] sm:$0xff] %vm491, %v483
          %493 = vst.msk [vmem:[#allocation2 + $0x8] sm:$0xff] %vm491, %v488
        $region64: #{tpu_custom_call.1} parent=43 // pred_fallthru
          _
        %v494 = vld [vmem:[%s312] sm:$0xff]
        %vm495 = vcmask 261120
        %v496 = vsel %vm495, %v494, 0.0
        %497 = vadd.xlane.f32.xlu0 %v496
        %v498 = vpop.xlane.xlu0 %497
        %v499 = vrcp.pop 32.0
        %v500 = vmul.f32 %v498, %v499
        %v501 = vsub.f32 %v494, %v500
        %v502 = vmul.f32 %v501, %v501
        %v503 = vsel %vm495, %v502, 0.0
        %504 = vadd.xlane.f32.xlu0 %v503
        %v505 = vpop.xlane.xlu0 %504
        %v506 = vmul.f32 %v505, %v499
        %v507 = vadd.f32 %v506, 1e-05
        %v508 = vrsqrt.pop %v507
        %v509 = vmul.f32 %v501, %v508
        %v511 = vlaneseq
        %v512 = vshrl.u32 %v511, 7
        %v513 = vsub.s32 0, %v512
        %v514 = vrot.slane %v354, %v513
        %v516 = vmul.f32 %v509, %v514
        %v518 = vlaneseq
        %v519 = vshrl.u32 %v518, 7
        %v520 = vsub.s32 0, %v519
        %v521 = vrot.slane %v355, %v520
        %v523 = vadd.f32 %v516, %v521
        %v524 = vld [vmem:[#allocation9] sm:$0xff]
        %v525 = vld [vmem:[#allocation9 + $0x8] sm:$0xff]
        %v526 = vld [vmem:[#allocation9 + $0x10] sm:$0xff]
        %v527 = vld [vmem:[#allocation9 + $0x18] sm:$0xff]
        %v529 = vsel %vm495, %v523, 0
        %531 = vmatprep.subr.mxu0 0.0
        %532 = vmatpush1.msra.mxu0 %v524
        %533 = vmatprep.subr.mxu0 0.0
        %534 = vmatpush1.msra.mxu0 %v525
        %535 = vmatprep.subr.mxu0 0.0
        %536 = vmatpush1.msra.mxu0 %v526
        %537 = vmatprep.subr.mxu0 0.0
        %538 = vmatpush1.msra.mxu0 %v527
        %539 = vmatprep.subr.mxu0 0.0
        %540 = vmatpush1.msra.mxu0 0.0
        %541 = vmatprep.subr.mxu0 0.0
        %542 = vmatpush1.msra.mxu0 0.0
        %543 = vmatprep.subr.mxu0 0.0
        %544 = vmatpush1.msra.mxu0 0.0
        %545 = vmatprep.subr.mxu0 0.0
        %546 = vmatpush1.msra.mxu0 0.0
        %547 = vmatprep.subr.mxu0 0.0
        %548 = vmatpush1.msra.mxu0 0.0
        %549 = vmatprep.subr.mxu0 0.0
        %550 = vmatpush1.msra.mxu0 0.0
        %551 = vmatprep.subr.mxu0 0.0
        %552 = vmatpush1.msra.mxu0 0.0
        %553 = vmatprep.subr.mxu0 0.0
        %554 = vmatpush1.msra.mxu0 0.0
        %555 = vmatprep.subr.mxu0 0.0
        %556 = vmatpush1.msra.mxu0 0.0
        %557 = vmatprep.subr.mxu0 0.0
        %558 = vmatpush1.msra.mxu0 0.0
        %559 = vmatprep.subr.mxu0 0.0
        %560 = vmatpush1.msra.mxu0 0.0
        %561 = vmatprep.subr.mxu0 0.0
        %562 = vmatpush1.msra.mxu0 0.0
        %563 = vmatprep.subr.mxu0 0.0
        %564 = vmatpush1.msra.mxu0 0.0
        %565 = vmatprep.subr.mxu0 0.0
        %566 = vmatpush1.msra.mxu0 0.0
        %567 = vmatprep.subr.mxu0 0.0
        %568 = vmatpush1.msra.mxu0 0.0
        %569 = vmatprep.subr.mxu0 0.0
        %570 = vmatpush1.msra.mxu0 0.0
        %571 = vmatprep.subr.mxu0 0.0
        %572 = vmatpush1.msra.mxu0 0.0
        %573 = vmatprep.subr.mxu0 0.0
        %574 = vmatpush1.msra.mxu0 0.0
        %575 = vmatprep.subr.mxu0 0.0
        %576 = vmatpush1.msra.mxu0 0.0
        %577 = vmatprep.subr.mxu0 0.0
        %578 = vmatpush1.msra.mxu0 0.0
        %579 = vmatprep.subr.mxu0 0.0
        %580 = vmatpush1.msra.mxu0 0.0
        %581 = vmatprep.subr.mxu0 0.0
        %582 = vmatpush1.msra.mxu0 0.0
        %583 = vmatprep.subr.mxu0 0.0
        %584 = vmatpush1.msra.mxu0 0.0
        %585 = vmatprep.subr.mxu0 0.0
        %586 = vmatpush1.msra.mxu0 0.0
        %587 = vmatprep.subr.mxu0 0.0
        %588 = vmatpush1.msra.mxu0 0.0
        %589 = vmatprep.subr.mxu0 0.0
        %590 = vmatpush1.msra.mxu0 0.0
        %591 = vmatprep.subr.mxu0 0.0
        %592 = vmatpush1.msra.mxu0 0.0
        %593 = vmatprep.subr.mxu0 0.0
        %594 = vmatpush1.msra.mxu0 0.0
        %595 = vmatprep.mubr.f32.mxu0 0.0
        %596 = vmatmul.mubr.f32.gmra.mrb[0].mxu0 %v529
        %v597 = vpop.f32.mrb[0].mxu0
        %v598 = vadd.f32 0.0, %v597
        %v599 = vpop.f32.mrb[0].mxu0
        %600 = vdwg.mxu0
        %v601 = vld [vmem:[#allocation2] sm:$0xff]
        %v602 = vld [vmem:[#allocation2 + $0x8] sm:$0xff]
        %vm603 = vcmask 64512
        %v605 = vsel %vm603, %v598, 0
        %v608 = vsel %vm603, %v601, 0
        %v611 = vsel %vm603, %v602, 0
        %613 = vmatprep.subr.mxu0 0.0
        %614 = vmatpush1.xpose.msra.mxu0 %v608
        %615 = vmatprep.subr.mxu0 0.0
        %616 = vmatpush1.xpose.msra.mxu0 %v611
        %617 = vmatprep.subr.mxu0 0.0
        %618 = vmatpush1.xpose.msra.mxu0 0.0
        %619 = vmatprep.subr.mxu0 0.0
        %620 = vmatpush1.xpose.msra.mxu0 0.0
        %621 = vmatprep.subr.mxu0 0.0
        %622 = vmatpush1.xpose.msra.mxu0 0.0
        %623 = vmatprep.subr.mxu0 0.0
        %624 = vmatpush1.xpose.msra.mxu0 0.0
        %625 = vmatprep.subr.mxu0 0.0
        %626 = vmatpush1.xpose.msra.mxu0 0.0
        %627 = vmatprep.subr.mxu0 0.0
        %628 = vmatpush1.xpose.msra.mxu0 0.0
        %629 = vmatprep.subr.mxu0 0.0
        %630 = vmatpush1.xpose.msra.mxu0 0.0
        %631 = vmatprep.subr.mxu0 0.0
        %632 = vmatpush1.xpose.msra.mxu0 0.0
        %633 = vmatprep.subr.mxu0 0.0
        %634 = vmatpush1.xpose.msra.mxu0 0.0
        %635 = vmatprep.subr.mxu0 0.0
        %636 = vmatpush1.xpose.msra.mxu0 0.0
        %637 = vmatprep.subr.mxu0 0.0
        %638 = vmatpush1.xpose.msra.mxu0 0.0
        %639 = vmatprep.subr.mxu0 0.0
        %640 = vmatpush1.xpose.msra.mxu0 0.0
        %641 = vmatprep.subr.mxu0 0.0
        %642 = vmatpush1.xpose.msra.mxu0 0.0
        %643 = vmatprep.subr.mxu0 0.0
        %644 = vmatpush1.xpose.msra.mxu0 0.0
        %645 = vmatprep.subr.mxu0 0.0
        %646 = vmatpush1.xpose.msra.mxu0 0.0
        %647 = vmatprep.subr.mxu0 0.0
        %648 = vmatpush1.xpose.msra.mxu0 0.0
        %649 = vmatprep.subr.mxu0 0.0
        %650 = vmatpush1.xpose.msra.mxu0 0.0
        %651 = vmatprep.subr.mxu0 0.0
        %652 = vmatpush1.xpose.msra.mxu0 0.0
        %653 = vmatprep.subr.mxu0 0.0
        %654 = vmatpush1.xpose.msra.mxu0 0.0
        %655 = vmatprep.subr.mxu0 0.0
        %656 = vmatpush1.xpose.msra.mxu0 0.0
        %657 = vmatprep.subr.mxu0 0.0
        %658 = vmatpush1.xpose.msra.mxu0 0.0
        %659 = vmatprep.subr.mxu0 0.0
        %660 = vmatpush1.xpose.msra.mxu0 0.0
        %661 = vmatprep.subr.mxu0 0.0
        %662 = vmatpush1.xpose.msra.mxu0 0.0
        %663 = vmatprep.subr.mxu0 0.0
        %664 = vmatpush1.xpose.msra.mxu0 0.0
        %665 = vmatprep.subr.mxu0 0.0
        %666 = vmatpush1.xpose.msra.mxu0 0.0
        %667 = vmatprep.subr.mxu0 0.0
        %668 = vmatpush1.xpose.msra.mxu0 0.0
        %669 = vmatprep.subr.mxu0 0.0
        %670 = vmatpush1.xpose.msra.mxu0 0.0
        %671 = vmatprep.subr.mxu0 0.0
        %672 = vmatpush1.xpose.msra.mxu0 0.0
        %673 = vmatprep.subr.mxu0 0.0
        %674 = vmatpush1.xpose.msra.mxu0 0.0
        %675 = vmatprep.subr.mxu0 0.0
        %676 = vmatpush1.xpose.msra.mxu0 0.0
        %677 = vmatprep.mubr.f32.mxu0 0.0
        %678 = vmatmul.mubr.f32.gmra.mrb[0].mxu0 %v605
        %v679 = vpop.f32.mrb[0].mxu0
        %v680 = vadd.f32 0.0, %v679
        %v681 = vpop.f32.mrb[0].mxu0
        %682 = vdwg.mxu0
        %vm683 = vcmask 130048
        %v684 = vsel %vm683, %v680, -inf
        %685 = vmax.xlane.f32.xlu0 %v684
        %v686 = vpop.xlane.xlu0 %685
        %v687 = vsub.f32 %v680, %v686
        %v688 = vmul.f32 %v687, 1.442695
        %v689 = vpow.pop %v688
        %v690 = vsel %vm683, %v689, 0.0
        %691 = vadd.xlane.f32.xlu0 %v690
        %v692 = vpop.xlane.xlu0 %691
        %693 = vrot.lane.b32.xlu0 %v601, 96
        %v694 = vpop.permute.xlu0 %693
        %695 = vrot.lane.b32.xlu0 %v602, 96
        %v696 = vpop.permute.xlu0 %695
        %v700 = vsel %vm683, %v689, 0
        %702 = vmatprep.subr.mxu0 0.0
        %703 = vmatpush1.msra.mxu0 %v694
        %704 = vmatprep.subr.mxu0 0.0
        %705 = vmatpush1.msra.mxu0 %v696
        %706 = vmatprep.subr.mxu0 0.0
        %707 = vmatpush1.msra.mxu0 0.0
        %708 = vmatprep.subr.mxu0 0.0
        %709 = vmatpush1.msra.mxu0 0.0
        %710 = vmatprep.subr.mxu0 0.0
        %711 = vmatpush1.msra.mxu0 0.0
        %712 = vmatprep.subr.mxu0 0.0
        %713 = vmatpush1.msra.mxu0 0.0
        %714 = vmatprep.subr.mxu0 0.0
        %715 = vmatpush1.msra.mxu0 0.0
        %716 = vmatprep.subr.mxu0 0.0
        %717 = vmatpush1.msra.mxu0 0.0
        %718 = vmatprep.subr.mxu0 0.0
        %719 = vmatpush1.msra.mxu0 0.0
        %720 = vmatprep.subr.mxu0 0.0
        %721 = vmatpush1.msra.mxu0 0.0
        %722 = vmatprep.subr.mxu0 0.0
        %723 = vmatpush1.msra.mxu0 0.0
        %724 = vmatprep.subr.mxu0 0.0
        %725 = vmatpush1.msra.mxu0 0.0
        %726 = vmatprep.subr.mxu0 0.0
        %727 = vmatpush1.msra.mxu0 0.0
        %728 = vmatprep.subr.mxu0 0.0
        %729 = vmatpush1.msra.mxu0 0.0
        %730 = vmatprep.subr.mxu0 0.0
        %731 = vmatpush1.msra.mxu0 0.0
        %732 = vmatprep.subr.mxu0 0.0
        %733 = vmatpush1.msra.mxu0 0.0
        %734 = vmatprep.subr.mxu0 0.0
        %735 = vmatpush1.msra.mxu0 0.0
        %736 = vmatprep.subr.mxu0 0.0
        %737 = vmatpush1.msra.mxu0 0.0
        %738 = vmatprep.subr.mxu0 0.0
        %739 = vmatpush1.msra.mxu0 0.0
        %740 = vmatprep.subr.mxu0 0.0
        %741 = vmatpush1.msra.mxu0 0.0
        %742 = vmatprep.subr.mxu0 0.0
        %743 = vmatpush1.msra.mxu0 0.0
        %744 = vmatprep.subr.mxu0 0.0
        %745 = vmatpush1.msra.mxu0 0.0
        %746 = vmatprep.subr.mxu0 0.0
        %747 = vmatpush1.msra.mxu0 0.0
        %748 = vmatprep.subr.mxu0 0.0
        %749 = vmatpush1.msra.mxu0 0.0
        %750 = vmatprep.subr.mxu0 0.0
        %751 = vmatpush1.msra.mxu0 0.0
        %752 = vmatprep.subr.mxu0 0.0
        %753 = vmatpush1.msra.mxu0 0.0
        %754 = vmatprep.subr.mxu0 0.0
        %755 = vmatpush1.msra.mxu0 0.0
        %756 = vmatprep.subr.mxu0 0.0
        %757 = vmatpush1.msra.mxu0 0.0
        %758 = vmatprep.subr.mxu0 0.0
        %759 = vmatpush1.msra.mxu0 0.0
        %760 = vmatprep.subr.mxu0 0.0
        %761 = vmatpush1.msra.mxu0 0.0
        %762 = vmatprep.subr.mxu0 0.0
        %763 = vmatpush1.msra.mxu0 0.0
        %764 = vmatprep.subr.mxu0 0.0
        %765 = vmatpush1.msra.mxu0 0.0
        %766 = vmatprep.mubr.f32.mxu0 0.0
        %767 = vmatmul.mubr.f32.gmra.mrb[0].mxu0 %v700
        %v768 = vpop.f32.mrb[0].mxu0
        %v769 = vadd.f32 0.0, %v768
        %v770 = vpop.f32.mrb[0].mxu0
        %771 = vdwg.mxu0
        %v772 = vrcp.pop %v692
        %v773 = vmul.f32 %v769, %v772
        %774 = vst.msk [vmem:[#allocation3] sm:$0xff] %vm603, %v773
        %v775 = vld [vmem:[#allocation2] sm:$0xff]
        %v776 = vld [vmem:[#allocation2 + $0x8] sm:$0xff]
        %777 = vrot.lane.b32.xlu0 %v598, 120
        %v778 = vpop.permute.xlu0 %777
        %781 = vrot.lane.b32.xlu0 %v775, 120
        %v782 = vpop.permute.xlu0 %781
        %783 = vrot.lane.b32.xlu0 %v776, 120
        %v784 = vpop.permute.xlu0 %783
        %v785 = vsel %vm603, %v778, 0
        %v787 = vsel %vm603, %v782, 0
        %v789 = vsel %vm603, %v784, 0
        %791 = vmatprep.subr.mxu0 0.0
        %792 = vmatpush1.xpose.msra.mxu0 %v787
        %793 = vmatprep.subr.mxu0 0.0
        %794 = vmatpush1.xpose.msra.mxu0 %v789
        %795 = vmatprep.subr.mxu0 0.0
        %796 = vmatpush1.xpose.msra.mxu0 0.0
        %797 = vmatprep.subr.mxu0 0.0
        %798 = vmatpush1.xpose.msra.mxu0 0.0
        %799 = vmatprep.subr.mxu0 0.0
        %800 = vmatpush1.xpose.msra.mxu0 0.0
        %801 = vmatprep.subr.mxu0 0.0
        %802 = vmatpush1.xpose.msra.mxu0 0.0
        %803 = vmatprep.subr.mxu0 0.0
        %804 = vmatpush1.xpose.msra.mxu0 0.0
        %805 = vmatprep.subr.mxu0 0.0
        %806 = vmatpush1.xpose.msra.mxu0 0.0
        %807 = vmatprep.subr.mxu0 0.0
        %808 = vmatpush1.xpose.msra.mxu0 0.0
        %809 = vmatprep.subr.mxu0 0.0
        %810 = vmatpush1.xpose.msra.mxu0 0.0
        %811 = vmatprep.subr.mxu0 0.0
        %812 = vmatpush1.xpose.msra.mxu0 0.0
        %813 = vmatprep.subr.mxu0 0.0
        %814 = vmatpush1.xpose.msra.mxu0 0.0
        %815 = vmatprep.subr.mxu0 0.0
        %816 = vmatpush1.xpose.msra.mxu0 0.0
        %817 = vmatprep.subr.mxu0 0.0
        %818 = vmatpush1.xpose.msra.mxu0 0.0
        %819 = vmatprep.subr.mxu0 0.0
        %820 = vmatpush1.xpose.msra.mxu0 0.0
        %821 = vmatprep.subr.mxu0 0.0
        %822 = vmatpush1.xpose.msra.mxu0 0.0
        %823 = vmatprep.subr.mxu0 0.0
        %824 = vmatpush1.xpose.msra.mxu0 0.0
        %825 = vmatprep.subr.mxu0 0.0
        %826 = vmatpush1.xpose.msra.mxu0 0.0
        %827 = vmatprep.subr.mxu0 0.0
        %828 = vmatpush1.xpose.msra.mxu0 0.0
        %829 = vmatprep.subr.mxu0 0.0
        %830 = vmatpush1.xpose.msra.mxu0 0.0
        %831 = vmatprep.subr.mxu0 0.0
        %832 = vmatpush1.xpose.msra.mxu0 0.0
        %833 = vmatprep.subr.mxu0 0.0
        %834 = vmatpush1.xpose.msra.mxu0 0.0
        %835 = vmatprep.subr.mxu0 0.0
        %836 = vmatpush1.xpose.msra.mxu0 0.0
        %837 = vmatprep.subr.mxu0 0.0
        %838 = vmatpush1.xpose.msra.mxu0 0.0
        %839 = vmatprep.subr.mxu0 0.0
        %840 = vmatpush1.xpose.msra.mxu0 0.0
        %841 = vmatprep.subr.mxu0 0.0
        %842 = vmatpush1.xpose.msra.mxu0 0.0
        %843 = vmatprep.subr.mxu0 0.0
        %844 = vmatpush1.xpose.msra.mxu0 0.0
        %845 = vmatprep.subr.mxu0 0.0
        %846 = vmatpush1.xpose.msra.mxu0 0.0
        %847 = vmatprep.subr.mxu0 0.0
        %848 = vmatpush1.xpose.msra.mxu0 0.0
        %849 = vmatprep.subr.mxu0 0.0
        %850 = vmatpush1.xpose.msra.mxu0 0.0
        %851 = vmatprep.subr.mxu0 0.0
        %852 = vmatpush1.xpose.msra.mxu0 0.0
        %853 = vmatprep.subr.mxu0 0.0
        %854 = vmatpush1.xpose.msra.mxu0 0.0
        %855 = vmatprep.mubr.f32.mxu0 0.0
        %856 = vmatmul.mubr.f32.gmra.mrb[0].mxu0 %v785
        %v857 = vpop.f32.mrb[0].mxu0
        %v858 = vadd.f32 0.0, %v857
        %v859 = vpop.f32.mrb[0].mxu0
        %860 = vdwg.mxu0
        %v861 = vsel %vm683, %v858, -inf
        %862 = vmax.xlane.f32.xlu0 %v861
        %v863 = vpop.xlane.xlu0 %862
        %v864 = vsub.f32 %v858, %v863
        %v865 = vmul.f32 %v864, 1.442695
        %v866 = vpow.pop %v865
        %v867 = vsel %vm683, %v866, 0.0
        %868 = vadd.xlane.f32.xlu0 %v867
        %v869 = vpop.xlane.xlu0 %868
        %870 = vrot.lane.b32.xlu0 %v775, 88
        %v871 = vpop.permute.xlu0 %870
        %872 = vrot.lane.b32.xlu0 %v776, 88
        %v873 = vpop.permute.xlu0 %872
        %v877 = vsel %vm683, %v866, 0
        %879 = vmatprep.subr.mxu0 0.0
        %880 = vmatpush1.msra.mxu0 %v871
        %881 = vmatprep.subr.mxu0 0.0
        %882 = vmatpush1.msra.mxu0 %v873
        %883 = vmatprep.subr.mxu0 0.0
        %884 = vmatpush1.msra.mxu0 0.0
        %885 = vmatprep.subr.mxu0 0.0
        %886 = vmatpush1.msra.mxu0 0.0
        %887 = vmatprep.subr.mxu0 0.0
        %888 = vmatpush1.msra.mxu0 0.0
        %889 = vmatprep.subr.mxu0 0.0
        %890 = vmatpush1.msra.mxu0 0.0
        %891 = vmatprep.subr.mxu0 0.0
        %892 = vmatpush1.msra.mxu0 0.0
        %893 = vmatprep.subr.mxu0 0.0
        %894 = vmatpush1.msra.mxu0 0.0
        %895 = vmatprep.subr.mxu0 0.0
        %896 = vmatpush1.msra.mxu0 0.0
        %897 = vmatprep.subr.mxu0 0.0
        %898 = vmatpush1.msra.mxu0 0.0
        %899 = vmatprep.subr.mxu0 0.0
        %900 = vmatpush1.msra.mxu0 0.0
        %901 = vmatprep.subr.mxu0 0.0
        %902 = vmatpush1.msra.mxu0 0.0
        %903 = vmatprep.subr.mxu0 0.0
        %904 = vmatpush1.msra.mxu0 0.0
        %905 = vmatprep.subr.mxu0 0.0
        %906 = vmatpush1.msra.mxu0 0.0
        %907 = vmatprep.subr.mxu0 0.0
        %908 = vmatpush1.msra.mxu0 0.0
        %909 = vmatprep.subr.mxu0 0.0
        %910 = vmatpush1.msra.mxu0 0.0
        %911 = vmatprep.subr.mxu0 0.0
        %912 = vmatpush1.msra.mxu0 0.0
        %913 = vmatprep.subr.mxu0 0.0
        %914 = vmatpush1.msra.mxu0 0.0
        %915 = vmatprep.subr.mxu0 0.0
        %916 = vmatpush1.msra.mxu0 0.0
        %917 = vmatprep.subr.mxu0 0.0
        %918 = vmatpush1.msra.mxu0 0.0
        %919 = vmatprep.subr.mxu0 0.0
        %920 = vmatpush1.msra.mxu0 0.0
        %921 = vmatprep.subr.mxu0 0.0
        %922 = vmatpush1.msra.mxu0 0.0
        %923 = vmatprep.subr.mxu0 0.0
        %924 = vmatpush1.msra.mxu0 0.0
        %925 = vmatprep.subr.mxu0 0.0
        %926 = vmatpush1.msra.mxu0 0.0
        %927 = vmatprep.subr.mxu0 0.0
        %928 = vmatpush1.msra.mxu0 0.0
        %929 = vmatprep.subr.mxu0 0.0
        %930 = vmatpush1.msra.mxu0 0.0
        %931 = vmatprep.subr.mxu0 0.0
        %932 = vmatpush1.msra.mxu0 0.0
        %933 = vmatprep.subr.mxu0 0.0
        %934 = vmatpush1.msra.mxu0 0.0
        %935 = vmatprep.subr.mxu0 0.0
        %936 = vmatpush1.msra.mxu0 0.0
        %937 = vmatprep.subr.mxu0 0.0
        %938 = vmatpush1.msra.mxu0 0.0
        %939 = vmatprep.subr.mxu0 0.0
        %940 = vmatpush1.msra.mxu0 0.0
        %941 = vmatprep.subr.mxu0 0.0
        %942 = vmatpush1.msra.mxu0 0.0
        %943 = vmatprep.mubr.f32.mxu0 0.0
        %944 = vmatmul.mubr.f32.gmra.mrb[0].mxu0 %v877
        %v945 = vpop.f32.mrb[0].mxu0
        %v946 = vadd.f32 0.0, %v945
        %v947 = vpop.f32.mrb[0].mxu0
        %948 = vdwg.mxu0
        %v949 = vrcp.pop %v869
        %v950 = vmul.f32 %v946, %v949
        %952 = vrot.lane.b32.xlu0 %v950, 8
        %v953 = vpop.permute.xlu0 %952
        %vm955 = vcmask 130112
        %956 = vst.msk [vmem:[#allocation3] sm:$0xff] %vm955, %v953
        %v957 = vld [vmem:[#allocation2] sm:$0xff]
        %v958 = vld [vmem:[#allocation2 + $0x8] sm:$0xff]
        %959 = vrot.lane.b32.xlu0 %v598, 112
        %v960 = vpop.permute.xlu0 %959
        %963 = vrot.lane.b32.xlu0 %v957, 112
        %v964 = vpop.permute.xlu0 %963
        %965 = vrot.lane.b32.xlu0 %v958, 112
        %v966 = vpop.permute.xlu0 %965
        %v967 = vsel %vm603, %v960, 0
        %v969 = vsel %vm603, %v964, 0
        %v971 = vsel %vm603, %v966, 0
        %973 = vmatprep.subr.mxu0 0.0
        %974 = vmatpush1.xpose.msra.mxu0 %v969
        %975 = vmatprep.subr.mxu0 0.0
        %976 = vmatpush1.xpose.msra.mxu0 %v971
        %977 = vmatprep.subr.mxu0 0.0
        %978 = vmatpush1.xpose.msra.mxu0 0.0
        %979 = vmatprep.subr.mxu0 0.0
        %980 = vmatpush1.xpose.msra.mxu0 0.0
        %981 = vmatprep.subr.mxu0 0.0
        %982 = vmatpush1.xpose.msra.mxu0 0.0
        %983 = vmatprep.subr.mxu0 0.0
        %984 = vmatpush1.xpose.msra.mxu0 0.0
        %985 = vmatprep.subr.mxu0 0.0
        %986 = vmatpush1.xpose.msra.mxu0 0.0
        %987 = vmatprep.subr.mxu0 0.0
        %988 = vmatpush1.xpose.msra.mxu0 0.0
        %989 = vmatprep.subr.mxu0 0.0
        %990 = vmatpush1.xpose.msra.mxu0 0.0
        %991 = vmatprep.subr.mxu0 0.0
        %992 = vmatpush1.xpose.msra.mxu0 0.0
        %993 = vmatprep.subr.mxu0 0.0
        %994 = vmatpush1.xpose.msra.mxu0 0.0
        %995 = vmatprep.subr.mxu0 0.0
        %996 = vmatpush1.xpose.msra.mxu0 0.0
        %997 = vmatprep.subr.mxu0 0.0
        %998 = vmatpush1.xpose.msra.mxu0 0.0
        %999 = vmatprep.subr.mxu0 0.0
        %1000 = vmatpush1.xpose.msra.mxu0 0.0
        %1001 = vmatprep.subr.mxu0 0.0
        %1002 = vmatpush1.xpose.msra.mxu0 0.0
        %1003 = vmatprep.subr.mxu0 0.0
        %1004 = vmatpush1.xpose.msra.mxu0 0.0
        %1005 = vmatprep.subr.mxu0 0.0
        %1006 = vmatpush1.xpose.msra.mxu0 0.0
        %1007 = vmatprep.subr.mxu0 0.0
        %1008 = vmatpush1.xpose.msra.mxu0 0.0
        %1009 = vmatprep.subr.mxu0 0.0
        %1010 = vmatpush1.xpose.msra.mxu0 0.0
        %1011 = vmatprep.subr.mxu0 0.0
        %1012 = vmatpush1.xpose.msra.mxu0 0.0
        %1013 = vmatprep.subr.mxu0 0.0
        %1014 = vmatpush1.xpose.msra.mxu0 0.0
        %1015 = vmatprep.subr.mxu0 0.0
        %1016 = vmatpush1.xpose.msra.mxu0 0.0
        %1017 = vmatprep.subr.mxu0 0.0
        %1018 = vmatpush1.xpose.msra.mxu0 0.0
        %1019 = vmatprep.subr.mxu0 0.0
        %1020 = vmatpush1.xpose.msra.mxu0 0.0
        %1021 = vmatprep.subr.mxu0 0.0
        %1022 = vmatpush1.xpose.msra.mxu0 0.0
        %1023 = vmatprep.subr.mxu0 0.0
        %1024 = vmatpush1.xpose.msra.mxu0 0.0
        %1025 = vmatprep.subr.mxu0 0.0
        %1026 = vmatpush1.xpose.msra.mxu0 0.0
        %1027 = vmatprep.subr.mxu0 0.0
        %1028 = vmatpush1.xpose.msra.mxu0 0.0
        %1029 = vmatprep.subr.mxu0 0.0
        %1030 = vmatpush1.xpose.msra.mxu0 0.0
        %1031 = vmatprep.subr.mxu0 0.0
        %1032 = vmatpush1.xpose.msra.mxu0 0.0
        %1033 = vmatprep.subr.mxu0 0.0
        %1034 = vmatpush1.xpose.msra.mxu0 0.0
        %1035 = vmatprep.subr.mxu0 0.0
        %1036 = vmatpush1.xpose.msra.mxu0 0.0
        %1037 = vmatprep.mubr.f32.mxu0 0.0
        %1038 = vmatmul.mubr.f32.gmra.mrb[0].mxu0 %v967
        %v1039 = vpop.f32.mrb[0].mxu0
        %v1040 = vadd.f32 0.0, %v1039
        %v1041 = vpop.f32.mrb[0].mxu0
        %1042 = vdwg.mxu0
        %v1043 = vsel %vm683, %v1040, -inf
        %1044 = vmax.xlane.f32.xlu0 %v1043
        %v1045 = vpop.xlane.xlu0 %1044
        %v1046 = vsub.f32 %v1040, %v1045
        %v1047 = vmul.f32 %v1046, 1.442695
        %v1048 = vpow.pop %v1047
        %v1049 = vsel %vm683, %v1048, 0.0
        %1050 = vadd.xlane.f32.xlu0 %v1049
        %v1051 = vpop.xlane.xlu0 %1050
        %1052 = vrot.lane.b32.xlu0 %v957, 80
        %v1053 = vpop.permute.xlu0 %1052
        %1054 = vrot.lane.b32.xlu0 %v958, 80
        %v1055 = vpop.permute.xlu0 %1054
        %v1059 = vsel %vm683, %v1048, 0
        %1061 = vmatprep.subr.mxu0 0.0
        %1062 = vmatpush1.msra.mxu0 %v1053
        %1063 = vmatprep.subr.mxu0 0.0
        %1064 = vmatpush1.msra.mxu0 %v1055
        %1065 = vmatprep.subr.mxu0 0.0
        %1066 = vmatpush1.msra.mxu0 0.0
        %1067 = vmatprep.subr.mxu0 0.0
        %1068 = vmatpush1.msra.mxu0 0.0
        %1069 = vmatprep.subr.mxu0 0.0
        %1070 = vmatpush1.msra.mxu0 0.0
        %1071 = vmatprep.subr.mxu0 0.0
        %1072 = vmatpush1.msra.mxu0 0.0
        %1073 = vmatprep.subr.mxu0 0.0
        %1074 = vmatpush1.msra.mxu0 0.0
        %1075 = vmatprep.subr.mxu0 0.0
        %1076 = vmatpush1.msra.mxu0 0.0
        %1077 = vmatprep.subr.mxu0 0.0
        %1078 = vmatpush1.msra.mxu0 0.0
        %1079 = vmatprep.subr.mxu0 0.0
        %1080 = vmatpush1.msra.mxu0 0.0
        %1081 = vmatprep.subr.mxu0 0.0
        %1082 = vmatpush1.msra.mxu0 0.0
        %1083 = vmatprep.subr.mxu0 0.0
        %1084 = vmatpush1.msra.mxu0 0.0
        %1085 = vmatprep.subr.mxu0 0.0
        %1086 = vmatpush1.msra.mxu0 0.0
        %1087 = vmatprep.subr.mxu0 0.0
        %1088 = vmatpush1.msra.mxu0 0.0
        %1089 = vmatprep.subr.mxu0 0.0
        %1090 = vmatpush1.msra.mxu0 0.0
        %1091 = vmatprep.subr.mxu0 0.0
        %1092 = vmatpush1.msra.mxu0 0.0
        %1093 = vmatprep.subr.mxu0 0.0
        %1094 = vmatpush1.msra.mxu0 0.0
        %1095 = vmatprep.subr.mxu0 0.0
        %1096 = vmatpush1.msra.mxu0 0.0
        %1097 = vmatprep.subr.mxu0 0.0
        %1098 = vmatpush1.msra.mxu0 0.0
        %1099 = vmatprep.subr.mxu0 0.0
        %1100 = vmatpush1.msra.mxu0 0.0
        %1101 = vmatprep.subr.mxu0 0.0
        %1102 = vmatpush1.msra.mxu0 0.0
        %1103 = vmatprep.subr.mxu0 0.0
        %1104 = vmatpush1.msra.mxu0 0.0
        %1105 = vmatprep.subr.mxu0 0.0
        %1106 = vmatpush1.msra.mxu0 0.0
        %1107 = vmatprep.subr.mxu0 0.0
        %1108 = vmatpush1.msra.mxu0 0.0
        %1109 = vmatprep.subr.mxu0 0.0
        %1110 = vmatpush1.msra.mxu0 0.0
        %1111 = vmatprep.subr.mxu0 0.0
        %1112 = vmatpush1.msra.mxu0 0.0
        %1113 = vmatprep.subr.mxu0 0.0
        %1114 = vmatpush1.msra.mxu0 0.0
        %1115 = vmatprep.subr.mxu0 0.0
        %1116 = vmatpush1.msra.mxu0 0.0
        %1117 = vmatprep.subr.mxu0 0.0
        %1118 = vmatpush1.msra.mxu0 0.0
        %1119 = vmatprep.subr.mxu0 0.0
        %1120 = vmatpush1.msra.mxu0 0.0
        %1121 = vmatprep.subr.mxu0 0.0
        %1122 = vmatpush1.msra.mxu0 0.0
        %1123 = vmatprep.subr.mxu0 0.0
        %1124 = vmatpush1.msra.mxu0 0.0
        %1125 = vmatprep.mubr.f32.mxu0 0.0
        %1126 = vmatmul.mubr.f32.gmra.mrb[0].mxu0 %v1059
        %v1127 = vpop.f32.mrb[0].mxu0
        %v1128 = vadd.f32 0.0, %v1127
        %v1129 = vpop.f32.mrb[0].mxu0
        %1130 = vdwg.mxu0
        %v1131 = vrcp.pop %v1051
        %v1132 = vmul.f32 %v1128, %v1131
        %1134 = vrot.lane.b32.xlu0 %v1132, 16
        %v1135 = vpop.permute.xlu0 %1134
        %vm1137 = vcmask 195712
        %1138 = vst.msk [vmem:[#allocation3] sm:$0xff] %vm1137, %v1135
        %v1139 = vld [vmem:[#allocation2] sm:$0xff]
        %v1140 = vld [vmem:[#allocation2 + $0x8] sm:$0xff]
        %1141 = vrot.lane.b32.xlu0 %v598, 104
        %v1142 = vpop.permute.xlu0 %1141
        %1145 = vrot.lane.b32.xlu0 %v1139, 104
        %v1146 = vpop.permute.xlu0 %1145
        %1147 = vrot.lane.b32.xlu0 %v1140, 104
        %v1148 = vpop.permute.xlu0 %1147
        %v1149 = vsel %vm603, %v1142, 0
        %v1151 = vsel %vm603, %v1146, 0
        %v1153 = vsel %vm603, %v1148, 0
        %1155 = vmatprep.subr.mxu0 0.0
        %1156 = vmatpush1.xpose.msra.mxu0 %v1151
        %1157 = vmatprep.subr.mxu0 0.0
        %1158 = vmatpush1.xpose.msra.mxu0 %v1153
        %1159 = vmatprep.subr.mxu0 0.0
        %1160 = vmatpush1.xpose.msra.mxu0 0.0
        %1161 = vmatprep.subr.mxu0 0.0
        %1162 = vmatpush1.xpose.msra.mxu0 0.0
        %1163 = vmatprep.subr.mxu0 0.0
        %1164 = vmatpush1.xpose.msra.mxu0 0.0
        %1165 = vmatprep.subr.mxu0 0.0
        %1166 = vmatpush1.xpose.msra.mxu0 0.0
        %1167 = vmatprep.subr.mxu0 0.0
        %1168 = vmatpush1.xpose.msra.mxu0 0.0
        %1169 = vmatprep.subr.mxu0 0.0
        %1170 = vmatpush1.xpose.msra.mxu0 0.0
        %1171 = vmatprep.subr.mxu0 0.0
        %1172 = vmatpush1.xpose.msra.mxu0 0.0
        %1173 = vmatprep.subr.mxu0 0.0
        %1174 = vmatpush1.xpose.msra.mxu0 0.0
        %1175 = vmatprep.subr.mxu0 0.0
        %1176 = vmatpush1.xpose.msra.mxu0 0.0
        %1177 = vmatprep.subr.mxu0 0.0
        %1178 = vmatpush1.xpose.msra.mxu0 0.0
        %1179 = vmatprep.subr.mxu0 0.0
        %1180 = vmatpush1.xpose.msra.mxu0 0.0
        %1181 = vmatprep.subr.mxu0 0.0
        %1182 = vmatpush1.xpose.msra.mxu0 0.0
        %1183 = vmatprep.subr.mxu0 0.0
        %1184 = vmatpush1.xpose.msra.mxu0 0.0
        %1185 = vmatprep.subr.mxu0 0.0
        %1186 = vmatpush1.xpose.msra.mxu0 0.0
        %1187 = vmatprep.subr.mxu0 0.0
        %1188 = vmatpush1.xpose.msra.mxu0 0.0
        %1189 = vmatprep.subr.mxu0 0.0
        %1190 = vmatpush1.xpose.msra.mxu0 0.0
        %1191 = vmatprep.subr.mxu0 0.0
        %1192 = vmatpush1.xpose.msra.mxu0 0.0
        %1193 = vmatprep.subr.mxu0 0.0
        %1194 = vmatpush1.xpose.msra.mxu0 0.0
        %1195 = vmatprep.subr.mxu0 0.0
        %1196 = vmatpush1.xpose.msra.mxu0 0.0
        %1197 = vmatprep.subr.mxu0 0.0
        %1198 = vmatpush1.xpose.msra.mxu0 0.0
        %1199 = vmatprep.subr.mxu0 0.0
        %1200 = vmatpush1.xpose.msra.mxu0 0.0
        %1201 = vmatprep.subr.mxu0 0.0
        %1202 = vmatpush1.xpose.msra.mxu0 0.0
        %1203 = vmatprep.subr.mxu0 0.0
        %1204 = vmatpush1.xpose.msra.mxu0 0.0
        %1205 = vmatprep.subr.mxu0 0.0
        %1206 = vmatpush1.xpose.msra.mxu0 0.0
        %1207 = vmatprep.subr.mxu0 0.0
        %1208 = vmatpush1.xpose.msra.mxu0 0.0
        %1209 = vmatprep.subr.mxu0 0.0
        %1210 = vmatpush1.xpose.msra.mxu0 0.0
        %1211 = vmatprep.subr.mxu0 0.0
        %1212 = vmatpush1.xpose.msra.mxu0 0.0
        %1213 = vmatprep.subr.mxu0 0.0
        %1214 = vmatpush1.xpose.msra.mxu0 0.0
        %1215 = vmatprep.subr.mxu0 0.0
        %1216 = vmatpush1.xpose.msra.mxu0 0.0
        %1217 = vmatprep.subr.mxu0 0.0
        %1218 = vmatpush1.xpose.msra.mxu0 0.0
        %1219 = vmatprep.mubr.f32.mxu0 0.0
        %1220 = vmatmul.mubr.f32.gmra.mrb[0].mxu0 %v1149
        %v1221 = vpop.f32.mrb[0].mxu0
        %v1222 = vadd.f32 0.0, %v1221
        %v1223 = vpop.f32.mrb[0].mxu0
        %1224 = vdwg.mxu0
        %v1225 = vsel %vm683, %v1222, -inf
        %1226 = vmax.xlane.f32.xlu0 %v1225
        %v1227 = vpop.xlane.xlu0 %1226
        %v1228 = vsub.f32 %v1222, %v1227
        %v1229 = vmul.f32 %v1228, 1.442695
        %v1230 = vpow.pop %v1229
        %v1231 = vsel %vm683, %v1230, 0.0
        %1232 = vadd.xlane.f32.xlu0 %v1231
        %v1233 = vpop.xlane.xlu0 %1232
        %1234 = vrot.lane.b32.xlu0 %v1139, 72
        %v1235 = vpop.permute.xlu0 %1234
        %1236 = vrot.lane.b32.xlu0 %v1140, 72
        %v1237 = vpop.permute.xlu0 %1236
        %v1241 = vsel %vm683, %v1230, 0
        %1243 = vmatprep.subr.mxu0 0.0
        %1244 = vmatpush1.msra.mxu0 %v1235
        %1245 = vmatprep.subr.mxu0 0.0
        %1246 = vmatpush1.msra.mxu0 %v1237
        %1247 = vmatprep.subr.mxu0 0.0
        %1248 = vmatpush1.msra.mxu0 0.0
        %1249 = vmatprep.subr.mxu0 0.0
        %1250 = vmatpush1.msra.mxu0 0.0
        %1251 = vmatprep.subr.mxu0 0.0
        %1252 = vmatpush1.msra.mxu0 0.0
        %1253 = vmatprep.subr.mxu0 0.0
        %1254 = vmatpush1.msra.mxu0 0.0
        %1255 = vmatprep.subr.mxu0 0.0
        %1256 = vmatpush1.msra.mxu0 0.0
        %1257 = vmatprep.subr.mxu0 0.0
        %1258 = vmatpush1.msra.mxu0 0.0
        %1259 = vmatprep.subr.mxu0 0.0
        %1260 = vmatpush1.msra.mxu0 0.0
        %1261 = vmatprep.subr.mxu0 0.0
        %1262 = vmatpush1.msra.mxu0 0.0
        %1263 = vmatprep.subr.mxu0 0.0
        %1264 = vmatpush1.msra.mxu0 0.0
        %1265 = vmatprep.subr.mxu0 0.0
        %1266 = vmatpush1.msra.mxu0 0.0
        %1267 = vmatprep.subr.mxu0 0.0
        %1268 = vmatpush1.msra.mxu0 0.0
        %1269 = vmatprep.subr.mxu0 0.0
        %1270 = vmatpush1.msra.mxu0 0.0
        %1271 = vmatprep.subr.mxu0 0.0
        %1272 = vmatpush1.msra.mxu0 0.0
        %1273 = vmatprep.subr.mxu0 0.0
        %1274 = vmatpush1.msra.mxu0 0.0
        %1275 = vmatprep.subr.mxu0 0.0
        %1276 = vmatpush1.msra.mxu0 0.0
        %1277 = vmatprep.subr.mxu0 0.0
        %1278 = vmatpush1.msra.mxu0 0.0
        %1279 = vmatprep.subr.mxu0 0.0
        %1280 = vmatpush1.msra.mxu0 0.0
        %1281 = vmatprep.subr.mxu0 0.0
        %1282 = vmatpush1.msra.mxu0 0.0
        %1283 = vmatprep.subr.mxu0 0.0
        %1284 = vmatpush1.msra.mxu0 0.0
        %1285 = vmatprep.subr.mxu0 0.0
        %1286 = vmatpush1.msra.mxu0 0.0
        %1287 = vmatprep.subr.mxu0 0.0
        %1288 = vmatpush1.msra.mxu0 0.0
        %1289 = vmatprep.subr.mxu0 0.0
        %1290 = vmatpush1.msra.mxu0 0.0
        %1291 = vmatprep.subr.mxu0 0.0
        %1292 = vmatpush1.msra.mxu0 0.0
        %1293 = vmatprep.subr.mxu0 0.0
        %1294 = vmatpush1.msra.mxu0 0.0
        %1295 = vmatprep.subr.mxu0 0.0
        %1296 = vmatpush1.msra.mxu0 0.0
        %1297 = vmatprep.subr.mxu0 0.0
        %1298 = vmatpush1.msra.mxu0 0.0
        %1299 = vmatprep.subr.mxu0 0.0
        %1300 = vmatpush1.msra.mxu0 0.0
        %1301 = vmatprep.subr.mxu0 0.0
        %1302 = vmatpush1.msra.mxu0 0.0
        %1303 = vmatprep.subr.mxu0 0.0
        %1304 = vmatpush1.msra.mxu0 0.0
        %1305 = vmatprep.subr.mxu0 0.0
        %1306 = vmatpush1.msra.mxu0 0.0
        %1307 = vmatprep.mubr.f32.mxu0 0.0
        %1308 = vmatmul.mubr.f32.gmra.mrb[0].mxu0 %v1241
        %v1309 = vpop.f32.mrb[0].mxu0
        %v1310 = vadd.f32 0.0, %v1309
        %v1311 = vpop.f32.mrb[0].mxu0
        %1312 = vdwg.mxu0
        %v1313 = vrcp.pop %v1233
        %v1314 = vmul.f32 %v1310, %v1313
        %1316 = vrot.lane.b32.xlu0 %v1314, 24
        %v1317 = vpop.permute.xlu0 %1316
        %vm1319 = vcmask 261312
        %1320 = vst.msk [vmem:[#allocation3] sm:$0xff] %vm1319, %v1317
        %v1321 = vld [vmem:[#allocation3] sm:$0xff]
        %v1322 = vadd.f32 %v1321, %v523
        %1323 = vst.msk [vmem:[%s353] sm:$0xff] %vm495, %v1322
        %s1324 = sand.u32 %s187, 1
        %s1325 = scalar_lea.sflag [#allocation6], %s1324
        %s1326 = sand.u32 %s187, 1
        %s1327 = smul.addr %s1326, 8
        %s1328 = scalar_lea.vmem [#allocation12], %s1327
        // Predicated region
        $region65: #{tpu_custom_call.1} parent=43 // pred_check
          %p1329 = pneg %p197
        $region66: #{tpu_custom_call.1} parent=43 // pred_check_branch
          %1331 = sbr.rel (%p1329) target = $region68
        $region67: #{tpu_custom_call.1} parent=43 // pred_region
          %s1333 = ssub.s32 128, 128
          %1334 = vsyncadd %s1325, %s1333
          %s1335 = smul.addr %s31, 2
          %s1336 = sadd.s32 %s32, %s1335
          %s1337 = smul.addr %s1336, 128
          %s1338 = scalar_lea.hbm %s6, %s1337
          %s1340 = sshll.u32 %s1328, 4
          %s1341 = int_to_ptr.vmem [resolvable:$true] %s1340
          %1343 = dma.vmem_to_hbm [thread:$0]  %s1341, 128, %s1338, %s1325
        $region68: #{tpu_custom_call.1} parent=43 // pred_fallthru
          _
      $region44: #{tpu_custom_call.1} parent=5 // pred_fallthru
        _
      %p1344 = scmp.le.s32.totalorder 2, %s22
      // Predicated region
      $region69: #{tpu_custom_call.1} parent=5 // pred_check
        %p1345 = pneg %p1344
      $region70: #{tpu_custom_call.1} parent=5 // pred_check_branch
        %1347 = sbr.rel (%p1345) target = $region72
      $region71: #{tpu_custom_call.1} parent=5 // pred_region
        %s1348 = ssub.s32 %s22, 2
        // Predicated region
        $region73: #{tpu_custom_call.1} parent=71 // pred_check
          %p1349 = pneg %p203
        $region74: #{tpu_custom_call.1} parent=71 // pred_check_branch
          %1351 = sbr.rel (%p1349) target = $region76
        $region75: #{tpu_custom_call.1} parent=71 // pred_region
          %s1352 = sand.u32 %s188, 1
          %s1353 = scalar_lea.sflag [#allocation6], %s1352
          %s1354 = sand.u32 %s188, 1
          %s1355 = smul.addr %s1354, 8
          %s1356 = scalar_lea.vmem [#allocation12], %s1355
          %1357 = dma.done %s1353, 128
        $region76: #{tpu_custom_call.1} parent=71 // pred_fallthru
          _
      $region72: #{tpu_custom_call.1} parent=5 // pred_fallthru
        _
    $region6: #{tpu_custom_call.1} parent=1 // loop_footer
      %s26 = sadd.s32 1, %s22
    $region7: #{tpu_custom_call.1} parent=1 // loop_footer_branch
      %21 = sbr.rel target = $region3
    $region8: #{tpu_custom_call.1} parent=1 // loop_exit
      _
    %1358 = vsyncpa [#allocation5], 1
    %s1359 = scalar_lea.sflag [#allocation5], 1
    %1360 = vsyncpa %s1359, 1
    %1361 = vsyncpa [#allocation8], 1
    %s1362 = scalar_lea.sflag [#allocation8], 1
    %1363 = vsyncpa %s1362, 1
    %1364 = vsyncpa [#allocation11], 1
    %1365 = vsyncpa [#allocation6], 1
    %s1366 = scalar_lea.sflag [#allocation6], 1
    %1367 = vsyncpa %s1366, 1

</llo_original>
